<compile_context>
chip_gen: v7x
topology: tpu7x:2x2x1
jax: 0.10.0
libtpu: 0.0.40
codegen_flags: <defaults>
</compile_context>

<pallas_src>
import jax
import jax.numpy as jnp
from jax import lax
from jax.experimental import pallas as pl
from jax.experimental.pallas import tpu as pltpu

SMOOTH = 1.0        # AdaptiveSkeletonLoss.smooth
MAX_DIST = 10       # medial-axis max distance
_HALO = MAX_DIST - 1
_N_STATS = 16       # used lanes in the per-image stats row
_STATS_PAD = 128    # lane-dense output row -> unmasked vector stores
_UNROLL = 3         # manual unroll factor of the fused dilation loop


def _round_up(x, m):
    return (x + m - 1) // m * m


def _vmem_limit_bytes():
    # Perf review: derive the scoped-VMEM budget from the chip (v7x has only
    # 64 MiB physical per TensorCore) instead of hard-coding 64 MiB.
    try:
        cap = getattr(pltpu.get_tpu_info(), "vmem_capacity_bytes", None)
    except Exception:
        cap = None
    if not cap:
        cap = 64 * 1024 * 1024
    return int(cap) * 3 // 4


def _skeleton_stats_kernel(pred_ref, gt_ref, out_ref, pad_ref):
    """Per-image statistics for AdaptiveSkeletonLoss (C == 1).

    Lanes of the output row:
      0..2   sum(p*g), sum(p), sum(g)                               (dice)
      3..11  endpoint/midpoint/junction: sum(pc*gc), sum(pc), sum(gc)
      12..15 total_dist(p->g), #points(p>0.5), total_dist(g->p), #points(g>0.5)
    """
    p = pred_ref[0, 0].astype(jnp.float32)          # (H, W)
    g = gt_ref[0, 0].astype(jnp.float32)
    H, W = p.shape
    _, PH, PW = pad_ref.shape                        # zero-halo padded extents

    # ---- boundary masks for the (zero-padded) 3x3 neighbor conv ------------
    # (H,1)/(1,W) shapes broadcast inside the select; no full (H,W) iotas kept
    # live for the whole kernel.
    rows = lax.broadcasted_iota(jnp.int32, (H, 1), 0)
    cols = lax.broadcasted_iota(jnp.int32, (1, W), 1)
    row_ok = {1: rows < (H - 1), -1: rows >= 1}
    col_ok = {1: cols < (W - 1), -1: cols >= 1}

    def shift0(x, d, axis):
        # y[i] = x[i + d] along `axis`; out-of-bounds -> 0 (conv zero padding).
        # pltpu.roll matches jnp.roll semantics: y[k] = x[(k - shift) % n].
        y = pltpu.roll(x, (-d) % x.shape[axis], axis)
        ok = row_ok[d] if axis == 0 else col_ok[d]
        return jnp.where(ok, y, 0.0)

    def neighbor_count(x):
        # conv2d(x, 3x3 ones with zero center, padding=1); separable sums.
        c = x + shift0(x, 1, 1) + shift0(x, -1, 1)
        return c + shift0(c, 1, 0) + shift0(c, -1, 0) - x

    stats = [jnp.sum(p * g), jnp.sum(p), jnp.sum(g)]

    # Structural part -- same raw-value (unthresholded) semantics as the
    # reference: float equality on the neighbor count, `> 0.5` gating.
    def analyze(x):
        nb = neighbor_count(x)
        on = x > 0.5
        return ((nb == 1.0) & on, (nb == 2.0) & on, (nb > 2.0) & on)

    for pm, gm in zip(analyze(p), analyze(g)):       # endpoint, midpoint, junction
        pf = pm.astype(jnp.float32)
        gf = gm.astype(jnp.float32)
        stats += [jnp.sum(pf * gf), jnp.sum(pf), jnp.sum(gf)]

    n_pg = jnp.sum(jnp.where(p > 0.5, 1.0, 0.0))
    n_gp = jnp.sum(jnp.where(g > 0.5, 1.0, 0.0))

    # ---- medial-axis part: fused, halo-padded dilation loop -----------------
    # Build the zero-halo fields once (scratch: zero splat + masked sub-stores).
    pad_ref[...] = jnp.zeros(pad_ref.shape, jnp.float32)
    pad_ref[0, :H, :W] = g                           # reference for p->g chain
    pad_ref[1, :H, :W] = p                           # reference for g->p chain

    # TODO(synk): optional bf16 dilation field on v6e/v7x (verify packed-bf16
    # sublane rolls in pl.lower_as_mlir first); keep f32 on v5e.
    def maxpool3_halo(x):
        # F.max_pool2d(kernel=3, stride=1, padding=1) on the zero-halo grid:
        # plain cyclic rolls, no edge selects (halo >= number of dilations, so
        # wrap-around only ever reads halo zeros from the valid region).
        r = jnp.maximum(jnp.maximum(x, pltpu.roll(x, 1, 0)),
                        pltpu.roll(x, PH - 1, 0))
        return jnp.maximum(jnp.maximum(r, pltpu.roll(r, 1, 1)),
                           pltpu.roll(r, PW - 1, 1))

    def one_step(carry):
        d_pg, c_pg, d_gp, c_gp = carry
        d_pg = maxpool3_halo(d_pg)                   # two independent chains
        d_gp = maxpool3_halo(d_gp)                   # per step -> 2x ILP
        c_pg = c_pg + jnp.where(d_pg <= 0.5, 1.0, 0.0)
        c_gp = c_gp + jnp.where(d_gp <= 0.5, 1.0, 0.0)
        return d_pg, c_pg, d_gp, c_gp

    def body(_, carry):
        for _u in range(_UNROLL):                    # manual 3x unroll
            carry = one_step(carry)
        return carry

    ones = jnp.ones((PH, PW), jnp.float32)           # distance-1 minimum (ref.)
    carry = (pad_ref[0], ones, pad_ref[1], ones)
    steps = MAX_DIST - 1                             # 9 dilations suffice
    carry = lax.fori_loop(0, steps // _UNROLL, body, carry)
    for _u in range(steps % _UNROLL):                # remainder (0 for MAX_DIST=10)
        carry = one_step(carry)
    _, cnt_pg, _, cnt_gp = carry

    # The scratch still holds the padded (un-dilated) fields -> use them as the
    # padded target masks (halo is 0, so it contributes nothing to the sums).
    d_pg = jnp.sum(jnp.where(pad_ref[1] > 0.5, cnt_pg, 0.0))   # target = pred
    d_gp = jnp.sum(jnp.where(pad_ref[0] > 0.5, cnt_gp, 0.0))   # target = gt
    stats += [d_pg, n_pg, d_gp, n_gp]

    # Pack the 16 scalars into one lane-dense (1, 128) row: independent masked
    # terms combined with a balanced tree add (no serial 16-deep where chain).
    lane = lax.broadcasted_iota(jnp.int32, (1, _STATS_PAD), 1)
    terms = [jnp.where(lane == k, v.astype(jnp.float32), 0.0)
             for k, v in enumerate(stats)]
    while len(terms) > 1:
        nxt = [terms[i] + terms[i + 1] for i in range(0, len(terms) - 1, 2)]
        if len(terms) % 2:
            nxt.append(terms[-1])
        terms = nxt
    out_ref[0] = terms[0]


def _skeleton_stats(pred, gt):
    B, C, H, W = pred.shape
    assert C == 1, "AdaptiveSkeletonLoss expects single-channel skeletons"
    PH = _round_up(H + _HALO, 8)                     # one-sided zero halo
    PW = _round_up(W + _HALO, 128)
    blk = (1, C, H, W)
    idx = lambda i: (i, 0, 0, 0)
    # TODO(synk): for large images on v7x (64 MiB VMEM), add an H-tile grid axis
    # with a (MAX_DIST-1)-row halo (or per-tile partial sums); full-image blocks
    # are fine at the sizes used here (and up to ~1024^2 on v5e/v6e).
    # TODO(synk): when production W < 128, pack several images along the lane
    # axis (block (LB,1,H,W) reshaped to (H, LB*W) with per-image column masks)
    # to fill all 128 lanes instead of W/128 of them.
    # TODO(synk): on v7x with B == 1 or odd, add a second parallel grid axis
    # (e.g. split the two dilation directions) so both TensorCores stay busy.
    return pl.pallas_call(
        _skeleton_stats_kernel,
        out_shape=jax.ShapeDtypeStruct((B, 1, _STATS_PAD), jnp.float32),
        grid_spec=pltpu.PrefetchScalarGridSpec(
            num_scalar_prefetch=0,
            grid=(B,),
            in_specs=[pl.BlockSpec(blk, idx), pl.BlockSpec(blk, idx)],
            out_specs=pl.BlockSpec((1, 1, _STATS_PAD), lambda i: (i, 0, 0)),
            scratch_shapes=[pltpu.VMEM((2, PH, PW), jnp.float32)],
        ),
        compiler_params=pltpu.CompilerParams(
            dimension_semantics=("parallel",),
            vmem_limit_bytes=_vmem_limit_bytes(),
        ),
    )(pred, gt)


@jax.jit
def adaptive_skeleton_loss(pred_skel, gt_skel):
    """Forward pass of AdaptiveSkeletonLoss (apply_nonlin=None, smooth=1.0)."""
    if pred_skel.ndim == 3:
        pred_skel = pred_skel[:, None]
    if gt_skel.ndim == 3:
        gt_skel = gt_skel[:, None]

    st = _skeleton_stats(pred_skel, gt_skel)[:, 0, :_N_STATS]   # (B, 16)

    # dice term
    inter, psum, gsum = st[:, 0], st[:, 1], st[:, 2]
    dice = (2.0 * inter + SMOOTH) / (psum + gsum + SMOOTH)
    dice_loss = 1.0 - jnp.mean(dice)

    # structural term
    def iou(base):
        i, sp, sg = st[:, base], st[:, base + 1], st[:, base + 2]
        return (i + SMOOTH) / (sp + sg - i + SMOOTH)

    end_iou, mid_iou, junc_iou = iou(3), iou(6), iou(9)
    gt_end, gt_mid, gt_junc = st[:, 5], st[:, 8], st[:, 11]
    gt_total = gt_end + gt_junc + gt_mid + SMOOTH
    structural_loss = jnp.mean(
        1.0 - ((gt_end / gt_total) * end_iou
               + (gt_junc / gt_total) * junc_iou
               + (gt_mid / gt_total) * mid_iou))

    # medial-axis term
    p2g = st[:, 12] / (st[:, 13] + SMOOTH)
    g2p = st[:, 14] / (st[:, 15] + SMOOTH)
    medial_loss = jnp.mean(((p2g + g2p) / 2.0) / MAX_DIST)

    avg = (dice_loss + structural_loss + medial_loss) / 3.0
    bal = lambda x: x / (x + SMOOTH) * avg
    return bal(dice_loss) + bal(structural_loss) + bal(medial_loss)


# --------------------------- pure-JAX reference -----------------------------
def _shift_ref(x, d, axis, fill):
    n = x.shape[axis]
    y = jnp.roll(x, -d, axis=axis)
    idx = jnp.arange(n)
    ok = (idx < n - d) if d > 0 else (idx >= -d)
    shape = [1] * x.ndim
    shape[axis] = n
    return jnp.where(ok.reshape(shape), y, fill)


@jax.jit
def _reference_loss(pred, gt):
    """Literal JAX port of AdaptiveSkeletonLoss.forward (for validation)."""
    pred = pred.astype(jnp.float32)
    gt = gt.astype(jnp.float32)

    def neighbor_count(x):                            # conv2d(3x3 ring, pad=1)
        c = x + _shift_ref(x, 1, 3, 0.0) + _shift_ref(x, -1, 3, 0.0)
        return c + _shift_ref(c, 1, 2, 0.0) + _shift_ref(c, -1, 2, 0.0) - x

    def maxpool3(x):                                  # -inf padded max pool
        ninf = -jnp.inf
        r = jnp.maximum(jnp.maximum(x, _shift_ref(x, 1, 2, ninf)),
                        _shift_ref(x, -1, 2, ninf))
        return jnp.maximum(jnp.maximum(r, _shift_ref(r, 1, 3, ninf)),
                           _shift_ref(r, -1, 3, ninf))

    def analyze(x):
        nb = neighbor_count(x)
        on = x > 0.5
        return (nb == 1.0) & on, (nb == 2.0) & on, (nb > 2.0) & on

    def s23(x):
        return jnp.sum(x.astype(jnp.float32), axis=(2, 3))

    # dice
    dice = (2.0 * s23(pred * gt) + SMOOTH) / (s23(pred) + s23(gt) + SMOOTH)
    dice_l = 1.0 - jnp.mean(dice)

    # structural
    pe, pm, pj = analyze(pred)
    ge, gm, gj = analyze(gt)

    def iou(a, b):
        inter = s23(a.astype(jnp.float32) * b.astype(jnp.float32))
        union = s23(a) + s23(b) - inter
        return (inter + SMOOTH) / (union + SMOOTH)

    ge_c, gm_c, gj_c = s23(ge), s23(gm), s23(gj)
    gt_total = ge_c + gj_c + gm_c + SMOOTH
    structural = jnp.mean(1.0 - ((ge_c / gt_total) * iou(pe, ge)
                                 + (gj_c / gt_total) * iou(pj, gj)
                                 + (gm_c / gt_total) * iou(pm, gm)))

    # medial axis (literal found/distances loop)
    def distance_approximation(target, reference):
        dilated = reference
        distances = jnp.zeros_like(target)
        found = jnp.zeros(target.shape, bool)
        for d in range(1, MAX_DIST + 1):
            dilated = maxpool3(dilated)
            new = (dilated > 0.5) & (target > 0.5) & (~found)
            distances = jnp.where(new, float(d), distances)
            found = found | new
        tgt = target > 0.5
        distances = jnp.where(tgt & ~found, float(MAX_DIST), distances)
        return jnp.sum(distances, axis=(2, 3)) / (s23(tgt) + SMOOTH)

    p2g = distance_approximation(pred, gt)
    g2p = distance_approximation(gt, pred)
    medial = jnp.mean(((p2g + g2p) / 2.0) / MAX_DIST)

    avg = (dice_l + structural + medial) / 3.0
    bal = lambda x: x / (x + SMOOTH) * avg
    return bal(dice_l) + bal(structural) + bal(medial)


if __name__ == "__main__":
    key = jax.random.PRNGKey(0)
    k1, k2 = jax.random.split(key, 2)
    B, H, W = 2, 16, 16

    skeleton_pred = jax.random.uniform(k1, (B, 1, H, W), dtype=jnp.float32)  # soft skeleton
    skeleton_gt = (jax.random.uniform(k2, (B, 1, H, W)) > 0.8).astype(jnp.float32)

    loss = adaptive_skeleton_loss(skeleton_pred, skeleton_gt)
    loss = jax.block_until_ready(loss)
    ref = jax.block_until_ready(_reference_loss(skeleton_pred, skeleton_gt))

    assert jnp.isfinite(loss), loss
    assert jnp.allclose(loss, ref, rtol=1e-4, atol=1e-5), (loss, ref)
    print("KERNEL_OK")
</pallas_src>

<mosaic_0001>
module attributes {stable_mosaic.version = 11 : i64} {
  func.func @_skeleton_stats_kernel(%arg0: i32, %arg1: memref<1x1x16x16xf32, #tpu.memory_space<vmem>>, %arg2: memref<1x1x16x16xf32, #tpu.memory_space<vmem>>, %arg3: memref<1x1x128xf32, #tpu.memory_space<vmem>>, %arg4: memref<2x32x128xf32, #tpu.memory_space<vmem>>) attributes {dimension_semantics = [#tpu.dimension_semantics<parallel>], iteration_bounds = array<i64: 2>, scalar_prefetch = 0 : i64, scratch_operands = 1 : i64, tpu.core_type = #tpu.core_type<tc>, window_params = [{transform_indices = @transform_0, window_bounds = array<i64: 1, 1, 16, 16>}, {transform_indices = @transform_1, window_bounds = array<i64: 1, 1, 16, 16>}, {transform_indices = @transform_2, window_bounds = array<i64: 1, 1, 128>}]} {
    %c0 = arith.constant 0 : index
    %c0_0 = arith.constant 0 : index
    %c0_1 = arith.constant 0 : index
    %c0_2 = arith.constant 0 : index
    %0 = vector.load %arg1[%c0, %c0_0, %c0_1, %c0_2] : memref<1x1x16x16xf32, #tpu.memory_space<vmem>>, vector<1x1x16x16xf32>
    %1 = vector.shape_cast %0 : vector<1x1x16x16xf32> to vector<16x16xf32>
    %c0_3 = arith.constant 0 : index
    %c0_4 = arith.constant 0 : index
    %c0_5 = arith.constant 0 : index
    %c0_6 = arith.constant 0 : index
    %2 = vector.load %arg2[%c0_3, %c0_4, %c0_5, %c0_6] : memref<1x1x16x16xf32, #tpu.memory_space<vmem>>, vector<1x1x16x16xf32>
    %3 = vector.shape_cast %2 : vector<1x1x16x16xf32> to vector<16x16xf32>
    %4 = tpu.iota {dimensions = array<i32: 0>} : vector<16x1xi32>
    %5 = tpu.iota {dimensions = array<i32: 1>} : vector<1x16xi32>
    %c15_i32 = arith.constant 15 : i32
    %6 = vector.broadcast %c15_i32 : i32 to vector<16x1xi32>
    %7 = arith.cmpi slt, %4, %6 : vector<16x1xi32>
    %c1_i32 = arith.constant 1 : i32
    %8 = vector.broadcast %c1_i32 : i32 to vector<16x1xi32>
    %9 = arith.cmpi sge, %4, %8 : vector<16x1xi32>
    %c15_i32_7 = arith.constant 15 : i32
    %10 = vector.broadcast %c15_i32_7 : i32 to vector<1x16xi32>
    %11 = arith.cmpi slt, %5, %10 : vector<1x16xi32>
    %c1_i32_8 = arith.constant 1 : i32
    %12 = vector.broadcast %c1_i32_8 : i32 to vector<1x16xi32>
    %13 = arith.cmpi sge, %5, %12 : vector<1x16xi32>
    %14 = arith.mulf %1, %3 : vector<16x16xf32>
    %15 = vector.shape_cast %14 : vector<16x16xf32> to vector<1x16x16xf32>
    %cst = arith.constant dense<0.000000e+00> : vector<1xf32>
    %16 = vector.multi_reduction <add>, %15, %cst [1, 2] : vector<1x16x16xf32> to vector<1xf32>
    %17 = vector.shape_cast %16 : vector<1xf32> to vector<1x1x1xf32>
    %18 = vector.extract %17[0, 0, 0] : f32 from vector<1x1x1xf32>
    %19 = vector.shape_cast %1 : vector<16x16xf32> to vector<1x16x16xf32>
    %cst_9 = arith.constant dense<0.000000e+00> : vector<1xf32>
    %20 = vector.multi_reduction <add>, %19, %cst_9 [1, 2] : vector<1x16x16xf32> to vector<1xf32>
    %21 = vector.shape_cast %20 : vector<1xf32> to vector<1x1x1xf32>
    %22 = vector.extract %21[0, 0, 0] : f32 from vector<1x1x1xf32>
    %23 = vector.shape_cast %3 : vector<16x16xf32> to vector<1x16x16xf32>
    %cst_10 = arith.constant dense<0.000000e+00> : vector<1xf32>
    %24 = vector.multi_reduction <add>, %23, %cst_10 [1, 2] : vector<1x16x16xf32> to vector<1xf32>
    %25 = vector.shape_cast %24 : vector<1xf32> to vector<1x1x1xf32>
    %26 = vector.extract %25[0, 0, 0] : f32 from vector<1x1x1xf32>
    %c15_i32_11 = arith.constant 15 : i32
    %27 = tpu.dynamic_rotate %1 by %c15_i32_11 dim 1 : vector<16x16xf32>, i32 -> vector<16x16xf32>
    %cst_12 = arith.constant 0.000000e+00 : f32
    %28 = vector.shape_cast %11 : vector<1x16xi1> to vector<1x16xi1>
    %29 = vector.broadcast %28 : vector<1x16xi1> to vector<16x16xi1>
    %30 = vector.broadcast %cst_12 : f32 to vector<16x16xf32>
    %31 = arith.select %29, %27, %30 : vector<16x16xi1>, vector<16x16xf32>
    %32 = arith.addf %1, %31 : vector<16x16xf32>
    %c1_i32_13 = arith.constant 1 : i32
    %33 = tpu.dynamic_rotate %1 by %c1_i32_13 dim 1 : vector<16x16xf32>, i32 -> vector<16x16xf32>
    %cst_14 = arith.constant 0.000000e+00 : f32
    %34 = vector.shape_cast %13 : vector<1x16xi1> to vector<1x16xi1>
    %35 = vector.broadcast %34 : vector<1x16xi1> to vector<16x16xi1>
    %36 = vector.broadcast %cst_14 : f32 to vector<16x16xf32>
    %37 = arith.select %35, %33, %36 : vector<16x16xi1>, vector<16x16xf32>
    %38 = arith.addf %32, %37 : vector<16x16xf32>
    %c15_i32_15 = arith.constant 15 : i32
    %39 = tpu.dynamic_rotate %38 by %c15_i32_15 dim 0 : vector<16x16xf32>, i32 -> vector<16x16xf32>
    %cst_16 = arith.constant 0.000000e+00 : f32
    %40 = vector.shape_cast %7 : vector<16x1xi1> to vector<16x1xi1>
    %41 = vector.broadcast %40 : vector<16x1xi1> to vector<16x16xi1>
    %42 = vector.broadcast %cst_16 : f32 to vector<16x16xf32>
    %43 = arith.select %41, %39, %42 : vector<16x16xi1>, vector<16x16xf32>
    %44 = arith.addf %38, %43 : vector<16x16xf32>
    %c1_i32_17 = arith.constant 1 : i32
    %45 = tpu.dynamic_rotate %38 by %c1_i32_17 dim 0 : vector<16x16xf32>, i32 -> vector<16x16xf32>
    %cst_18 = arith.constant 0.000000e+00 : f32
    %46 = vector.shape_cast %9 : vector<16x1xi1> to vector<16x1xi1>
    %47 = vector.broadcast %46 : vector<16x1xi1> to vector<16x16xi1>
    %48 = vector.broadcast %cst_18 : f32 to vector<16x16xf32>
    %49 = arith.select %47, %45, %48 : vector<16x16xi1>, vector<16x16xf32>
    %50 = arith.addf %44, %49 : vector<16x16xf32>
    %51 = arith.subf %50, %1 : vector<16x16xf32>
    %cst_19 = arith.constant 5.000000e-01 : f32
    %52 = vector.broadcast %cst_19 : f32 to vector<16x16xf32>
    %53 = arith.cmpf ogt, %1, %52 : vector<16x16xf32>
    %cst_20 = arith.constant 1.000000e+00 : f32
    %54 = vector.broadcast %cst_20 : f32 to vector<16x16xf32>
    %55 = arith.cmpf oeq, %51, %54 : vector<16x16xf32>
    %56 = arith.andi %55, %53 : vector<16x16xi1>
    %cst_21 = arith.constant 2.000000e+00 : f32
    %57 = vector.broadcast %cst_21 : f32 to vector<16x16xf32>
    %58 = arith.cmpf oeq, %51, %57 : vector<16x16xf32>
    %59 = arith.andi %58, %53 : vector<16x16xi1>
    %cst_22 = arith.constant 2.000000e+00 : f32
    %60 = vector.broadcast %cst_22 : f32 to vector<16x16xf32>
    %61 = arith.cmpf ogt, %51, %60 : vector<16x16xf32>
    %62 = arith.andi %61, %53 : vector<16x16xi1>
    %c15_i32_23 = arith.constant 15 : i32
    %63 = tpu.dynamic_rotate %3 by %c15_i32_23 dim 1 : vector<16x16xf32>, i32 -> vector<16x16xf32>
    %cst_24 = arith.constant 0.000000e+00 : f32
    %64 = vector.shape_cast %11 : vector<1x16xi1> to vector<1x16xi1>
    %65 = vector.broadcast %64 : vector<1x16xi1> to vector<16x16xi1>
    %66 = vector.broadcast %cst_24 : f32 to vector<16x16xf32>
    %67 = arith.select %65, %63, %66 : vector<16x16xi1>, vector<16x16xf32>
    %68 = arith.addf %3, %67 : vector<16x16xf32>
    %c1_i32_25 = arith.constant 1 : i32
    %69 = tpu.dynamic_rotate %3 by %c1_i32_25 dim 1 : vector<16x16xf32>, i32 -> vector<16x16xf32>
    %cst_26 = arith.constant 0.000000e+00 : f32
    %70 = vector.shape_cast %13 : vector<1x16xi1> to vector<1x16xi1>
    %71 = vector.broadcast %70 : vector<1x16xi1> to vector<16x16xi1>
    %72 = vector.broadcast %cst_26 : f32 to vector<16x16xf32>
    %73 = arith.select %71, %69, %72 : vector<16x16xi1>, vector<16x16xf32>
    %74 = arith.addf %68, %73 : vector<16x16xf32>
    %c15_i32_27 = arith.constant 15 : i32
    %75 = tpu.dynamic_rotate %74 by %c15_i32_27 dim 0 : vector<16x16xf32>, i32 -> vector<16x16xf32>
    %cst_28 = arith.constant 0.000000e+00 : f32
    %76 = vector.shape_cast %7 : vector<16x1xi1> to vector<16x1xi1>
    %77 = vector.broadcast %76 : vector<16x1xi1> to vector<16x16xi1>
    %78 = vector.broadcast %cst_28 : f32 to vector<16x16xf32>
    %79 = arith.select %77, %75, %78 : vector<16x16xi1>, vector<16x16xf32>
    %80 = arith.addf %74, %79 : vector<16x16xf32>
    %c1_i32_29 = arith.constant 1 : i32
    %81 = tpu.dynamic_rotate %74 by %c1_i32_29 dim 0 : vector<16x16xf32>, i32 -> vector<16x16xf32>
    %cst_30 = arith.constant 0.000000e+00 : f32
    %82 = vector.shape_cast %9 : vector<16x1xi1> to vector<16x1xi1>
    %83 = vector.broadcast %82 : vector<16x1xi1> to vector<16x16xi1>
    %84 = vector.broadcast %cst_30 : f32 to vector<16x16xf32>
    %85 = arith.select %83, %81, %84 : vector<16x16xi1>, vector<16x16xf32>
    %86 = arith.addf %80, %85 : vector<16x16xf32>
    %87 = arith.subf %86, %3 : vector<16x16xf32>
    %cst_31 = arith.constant 5.000000e-01 : f32
    %88 = vector.broadcast %cst_31 : f32 to vector<16x16xf32>
    %89 = arith.cmpf ogt, %3, %88 : vector<16x16xf32>
    %cst_32 = arith.constant 1.000000e+00 : f32
    %90 = vector.broadcast %cst_32 : f32 to vector<16x16xf32>
    %91 = arith.cmpf oeq, %87, %90 : vector<16x16xf32>
    %92 = arith.andi %91, %89 : vector<16x16xi1>
    %cst_33 = arith.constant 2.000000e+00 : f32
    %93 = vector.broadcast %cst_33 : f32 to vector<16x16xf32>
    %94 = arith.cmpf oeq, %87, %93 : vector<16x16xf32>
    %95 = arith.andi %94, %89 : vector<16x16xi1>
    %cst_34 = arith.constant 2.000000e+00 : f32
    %96 = vector.broadcast %cst_34 : f32 to vector<16x16xf32>
    %97 = arith.cmpf ogt, %87, %96 : vector<16x16xf32>
    %98 = arith.andi %97, %89 : vector<16x16xi1>
    %99 = arith.extui %56 : vector<16x16xi1> to vector<16x16xi32>
    %100 = arith.sitofp %99 : vector<16x16xi32> to vector<16x16xf32>
    %101 = arith.extui %92 : vector<16x16xi1> to vector<16x16xi32>
    %102 = arith.sitofp %101 : vector<16x16xi32> to vector<16x16xf32>
    %103 = arith.mulf %100, %102 : vector<16x16xf32>
    %104 = vector.shape_cast %103 : vector<16x16xf32> to vector<1x16x16xf32>
    %cst_35 = arith.constant dense<0.000000e+00> : vector<1xf32>
    %105 = vector.multi_reduction <add>, %104, %cst_35 [1, 2] : vector<1x16x16xf32> to vector<1xf32>
    %106 = vector.shape_cast %105 : vector<1xf32> to vector<1x1x1xf32>
    %107 = vector.extract %106[0, 0, 0] : f32 from vector<1x1x1xf32>
    %108 = vector.shape_cast %100 : vector<16x16xf32> to vector<1x16x16xf32>
    %cst_36 = arith.constant dense<0.000000e+00> : vector<1xf32>
    %109 = vector.multi_reduction <add>, %108, %cst_36 [1, 2] : vector<1x16x16xf32> to vector<1xf32>
    %110 = vector.shape_cast %109 : vector<1xf32> to vector<1x1x1xf32>
    %111 = vector.extract %110[0, 0, 0] : f32 from vector<1x1x1xf32>
    %112 = vector.shape_cast %102 : vector<16x16xf32> to vector<1x16x16xf32>
    %cst_37 = arith.constant dense<0.000000e+00> : vector<1xf32>
    %113 = vector.multi_reduction <add>, %112, %cst_37 [1, 2] : vector<1x16x16xf32> to vector<1xf32>
    %114 = vector.shape_cast %113 : vector<1xf32> to vector<1x1x1xf32>
    %115 = vector.extract %114[0, 0, 0] : f32 from vector<1x1x1xf32>
    %116 = arith.extui %59 : vector<16x16xi1> to vector<16x16xi32>
    %117 = arith.sitofp %116 : vector<16x16xi32> to vector<16x16xf32>
    %118 = arith.extui %95 : vector<16x16xi1> to vector<16x16xi32>
    %119 = arith.sitofp %118 : vector<16x16xi32> to vector<16x16xf32>
    %120 = arith.mulf %117, %119 : vector<16x16xf32>
    %121 = vector.shape_cast %120 : vector<16x16xf32> to vector<1x16x16xf32>
    %cst_38 = arith.constant dense<0.000000e+00> : vector<1xf32>
    %122 = vector.multi_reduction <add>, %121, %cst_38 [1, 2] : vector<1x16x16xf32> to vector<1xf32>
    %123 = vector.shape_cast %122 : vector<1xf32> to vector<1x1x1xf32>
    %124 = vector.extract %123[0, 0, 0] : f32 from vector<1x1x1xf32>
    %125 = vector.shape_cast %117 : vector<16x16xf32> to vector<1x16x16xf32>
    %cst_39 = arith.constant dense<0.000000e+00> : vector<1xf32>
    %126 = vector.multi_reduction <add>, %125, %cst_39 [1, 2] : vector<1x16x16xf32> to vector<1xf32>
    %127 = vector.shape_cast %126 : vector<1xf32> to vector<1x1x1xf32>
    %128 = vector.extract %127[0, 0, 0] : f32 from vector<1x1x1xf32>
    %129 = vector.shape_cast %119 : vector<16x16xf32> to vector<1x16x16xf32>
    %cst_40 = arith.constant dense<0.000000e+00> : vector<1xf32>
    %130 = vector.multi_reduction <add>, %129, %cst_40 [1, 2] : vector<1x16x16xf32> to vector<1xf32>
    %131 = vector.shape_cast %130 : vector<1xf32> to vector<1x1x1xf32>
    %132 = vector.extract %131[0, 0, 0] : f32 from vector<1x1x1xf32>
    %133 = arith.extui %62 : vector<16x16xi1> to vector<16x16xi32>
    %134 = arith.sitofp %133 : vector<16x16xi32> to vector<16x16xf32>
    %135 = arith.extui %98 : vector<16x16xi1> to vector<16x16xi32>
    %136 = arith.sitofp %135 : vector<16x16xi32> to vector<16x16xf32>
    %137 = arith.mulf %134, %136 : vector<16x16xf32>
    %138 = vector.shape_cast %137 : vector<16x16xf32> to vector<1x16x16xf32>
    %cst_41 = arith.constant dense<0.000000e+00> : vector<1xf32>
    %139 = vector.multi_reduction <add>, %138, %cst_41 [1, 2] : vector<1x16x16xf32> to vector<1xf32>
    %140 = vector.shape_cast %139 : vector<1xf32> to vector<1x1x1xf32>
    %141 = vector.extract %140[0, 0, 0] : f32 from vector<1x1x1xf32>
    %142 = vector.shape_cast %134 : vector<16x16xf32> to vector<1x16x16xf32>
    %cst_42 = arith.constant dense<0.000000e+00> : vector<1xf32>
    %143 = vector.multi_reduction <add>, %142, %cst_42 [1, 2] : vector<1x16x16xf32> to vector<1xf32>
    %144 = vector.shape_cast %143 : vector<1xf32> to vector<1x1x1xf32>
    %145 = vector.extract %144[0, 0, 0] : f32 from vector<1x1x1xf32>
    %146 = vector.shape_cast %136 : vector<16x16xf32> to vector<1x16x16xf32>
    %cst_43 = arith.constant dense<0.000000e+00> : vector<1xf32>
    %147 = vector.multi_reduction <add>, %146, %cst_43 [1, 2] : vector<1x16x16xf32> to vector<1xf32>
    %148 = vector.shape_cast %147 : vector<1xf32> to vector<1x1x1xf32>
    %149 = vector.extract %148[0, 0, 0] : f32 from vector<1x1x1xf32>
    %cst_44 = arith.constant 5.000000e-01 : f32
    %150 = vector.broadcast %cst_44 : f32 to vector<16x16xf32>
    %151 = arith.cmpf ogt, %1, %150 : vector<16x16xf32>
    %cst_45 = arith.constant 1.000000e+00 : f32
    %cst_46 = arith.constant 0.000000e+00 : f32
    %152 = vector.broadcast %cst_45 : f32 to vector<16x16xf32>
    %153 = vector.broadcast %cst_46 : f32 to vector<16x16xf32>
    %154 = arith.select %151, %152, %153 : vector<16x16xi1>, vector<16x16xf32>
    %155 = vector.shape_cast %154 : vector<16x16xf32> to vector<1x16x16xf32>
    %cst_47 = arith.constant dense<0.000000e+00> : vector<1xf32>
    %156 = vector.multi_reduction <add>, %155, %cst_47 [1, 2] : vector<1x16x16xf32> to vector<1xf32>
    %157 = vector.shape_cast %156 : vector<1xf32> to vector<1x1x1xf32>
    %158 = vector.extract %157[0, 0, 0] : f32 from vector<1x1x1xf32>
    %cst_48 = arith.constant 5.000000e-01 : f32
    %159 = vector.broadcast %cst_48 : f32 to vector<16x16xf32>
    %160 = arith.cmpf ogt, %3, %159 : vector<16x16xf32>
    %cst_49 = arith.constant 1.000000e+00 : f32
    %cst_50 = arith.constant 0.000000e+00 : f32
    %161 = vector.broadcast %cst_49 : f32 to vector<16x16xf32>
    %162 = vector.broadcast %cst_50 : f32 to vector<16x16xf32>
    %163 = arith.select %160, %161, %162 : vector<16x16xi1>, vector<16x16xf32>
    %164 = vector.shape_cast %163 : vector<16x16xf32> to vector<1x16x16xf32>
    %cst_51 = arith.constant dense<0.000000e+00> : vector<1xf32>
    %165 = vector.multi_reduction <add>, %164, %cst_51 [1, 2] : vector<1x16x16xf32> to vector<1xf32>
    %166 = vector.shape_cast %165 : vector<1xf32> to vector<1x1x1xf32>
    %167 = vector.extract %166[0, 0, 0] : f32 from vector<1x1x1xf32>
    %cst_52 = arith.constant 0.000000e+00 : f32
    %168 = vector.broadcast %cst_52 : f32 to vector<2x32x128xf32>
    %c0_53 = arith.constant 0 : index
    %c0_54 = arith.constant 0 : index
    %c0_55 = arith.constant 0 : index
    %169 = vector.load %arg4[%c0_53, %c0_54, %c0_55] : memref<2x32x128xf32, #tpu.memory_space<vmem>>, vector<2x32x128xf32>
    tpu.vector_store %arg4[%c0_53, %c0_54, %c0_55], %168 {strides = array<i32>} : memref<2x32x128xf32, #tpu.memory_space<vmem>>, vector<2x32x128xf32>,
    %c0_56 = arith.constant 0 : index
    %c0_57 = arith.constant 0 : index
    %c0_58 = arith.constant 0 : index
    %170 = vector.load %arg4[%c0_56, %c0_57, %c0_58] : memref<2x32x128xf32, #tpu.memory_space<vmem>>, vector<1x16x16xf32>
    %171 = vector.shape_cast %170 : vector<1x16x16xf32> to vector<16x16xf32>
    %172 = vector.shape_cast %3 : vector<16x16xf32> to vector<1x16x16xf32>
    tpu.vector_store %arg4[%c0_56, %c0_57, %c0_58], %172 {strides = array<i32>} : memref<2x32x128xf32, #tpu.memory_space<vmem>>, vector<1x16x16xf32>,
    %c1 = arith.constant 1 : index
    %c0_59 = arith.constant 0 : index
    %c0_60 = arith.constant 0 : index
    %173 = vector.load %arg4[%c1, %c0_59, %c0_60] : memref<2x32x128xf32, #tpu.memory_space<vmem>>, vector<1x16x16xf32>
    %174 = vector.shape_cast %173 : vector<1x16x16xf32> to vector<16x16xf32>
    %175 = vector.shape_cast %1 : vector<16x16xf32> to vector<1x16x16xf32>
    tpu.vector_store %arg4[%c1, %c0_59, %c0_60], %175 {strides = array<i32>} : memref<2x32x128xf32, #tpu.memory_space<vmem>>, vector<1x16x16xf32>,
    %cst_61 = arith.constant 1.000000e+00 : f32
    %176 = vector.broadcast %cst_61 : f32 to vector<32x128xf32>
    %c0_62 = arith.constant 0 : index
    %c0_63 = arith.constant 0 : index
    %c0_64 = arith.constant 0 : index
    %177 = vector.load %arg4[%c0_62, %c0_63, %c0_64] : memref<2x32x128xf32, #tpu.memory_space<vmem>>, vector<1x32x128xf32>
    %178 = vector.shape_cast %177 : vector<1x32x128xf32> to vector<32x128xf32>
    %c1_65 = arith.constant 1 : index
    %c0_66 = arith.constant 0 : index
    %c0_67 = arith.constant 0 : index
    %179 = vector.load %arg4[%c1_65, %c0_66, %c0_67] : memref<2x32x128xf32, #tpu.memory_space<vmem>>, vector<1x32x128xf32>
    %180 = vector.shape_cast %179 : vector<1x32x128xf32> to vector<32x128xf32>
    %c0_i32 = arith.constant 0 : i32
    %c3_i32 = arith.constant 3 : i32
    %181 = arith.addi %c0_i32, %c3_i32 : i32
    %c1_i32_68 = arith.constant 1 : i32
    %182:4 = scf.for %arg5 = %c0_i32 to %181 step %c1_i32_68 iter_args(%arg6 = %178, %arg7 = %176, %arg8 = %180, %arg9 = %176) -> (vector<32x128xf32>, vector<32x128xf32>, vector<32x128xf32>, vector<32x128xf32>)  : i32 {
      %c1_i32_104 = arith.constant 1 : i32
      %302 = tpu.dynamic_rotate %arg6 by %c1_i32_104 dim 0 : vector<32x128xf32>, i32 -> vector<32x128xf32>
      %303 = arith.maximumf %arg6, %302 : vector<32x128xf32>
      %c31_i32 = arith.constant 31 : i32
      %304 = tpu.dynamic_rotate %arg6 by %c31_i32 dim 0 : vector<32x128xf32>, i32 -> vector<32x128xf32>
      %305 = arith.maximumf %303, %304 : vector<32x128xf32>
      %c1_i32_105 = arith.constant 1 : i32
      %306 = tpu.dynamic_rotate %305 by %c1_i32_105 dim 1 : vector<32x128xf32>, i32 -> vector<32x128xf32>
      %307 = arith.maximumf %305, %306 : vector<32x128xf32>
      %c127_i32 = arith.constant 127 : i32
      %308 = tpu.dynamic_rotate %305 by %c127_i32 dim 1 : vector<32x128xf32>, i32 -> vector<32x128xf32>
      %309 = arith.maximumf %307, %308 : vector<32x128xf32>
      %c1_i32_106 = arith.constant 1 : i32
      %310 = tpu.dynamic_rotate %arg8 by %c1_i32_106 dim 0 : vector<32x128xf32>, i32 -> vector<32x128xf32>
      %311 = arith.maximumf %arg8, %310 : vector<32x128xf32>
      %c31_i32_107 = arith.constant 31 : i32
      %312 = tpu.dynamic_rotate %arg8 by %c31_i32_107 dim 0 : vector<32x128xf32>, i32 -> vector<32x128xf32>
      %313 = arith.maximumf %311, %312 : vector<32x128xf32>
      %c1_i32_108 = arith.constant 1 : i32
      %314 = tpu.dynamic_rotate %313 by %c1_i32_108 dim 1 : vector<32x128xf32>, i32 -> vector<32x128xf32>
      %315 = arith.maximumf %313, %314 : vector<32x128xf32>
      %c127_i32_109 = arith.constant 127 : i32
      %316 = tpu.dynamic_rotate %313 by %c127_i32_109 dim 1 : vector<32x128xf32>, i32 -> vector<32x128xf32>
      %317 = arith.maximumf %315, %316 : vector<32x128xf32>
      %cst_110 = arith.constant 5.000000e-01 : f32
      %318 = vector.broadcast %cst_110 : f32 to vector<32x128xf32>
      %319 = arith.cmpf ole, %309, %318 : vector<32x128xf32>
      %cst_111 = arith.constant 1.000000e+00 : f32
      %cst_112 = arith.constant 0.000000e+00 : f32
      %320 = vector.broadcast %cst_111 : f32 to vector<32x128xf32>
      %321 = vector.broadcast %cst_112 : f32 to vector<32x128xf32>
      %322 = arith.select %319, %320, %321 : vector<32x128xi1>, vector<32x128xf32>
      %323 = arith.addf %arg7, %322 : vector<32x128xf32>
      %cst_113 = arith.constant 5.000000e-01 : f32
      %324 = vector.broadcast %cst_113 : f32 to vector<32x128xf32>
      %325 = arith.cmpf ole, %317, %324 : vector<32x128xf32>
      %cst_114 = arith.constant 1.000000e+00 : f32
      %cst_115 = arith.constant 0.000000e+00 : f32
      %326 = vector.broadcast %cst_114 : f32 to vector<32x128xf32>
      %327 = vector.broadcast %cst_115 : f32 to vector<32x128xf32>
      %328 = arith.select %325, %326, %327 : vector<32x128xi1>, vector<32x128xf32>
      %329 = arith.addf %arg9, %328 : vector<32x128xf32>
      %c1_i32_116 = arith.constant 1 : i32
      %330 = tpu.dynamic_rotate %309 by %c1_i32_116 dim 0 : vector<32x128xf32>, i32 -> vector<32x128xf32>
      %331 = arith.maximumf %309, %330 : vector<32x128xf32>
      %c31_i32_117 = arith.constant 31 : i32
      %332 = tpu.dynamic_rotate %309 by %c31_i32_117 dim 0 : vector<32x128xf32>, i32 -> vector<32x128xf32>
      %333 = arith.maximumf %331, %332 : vector<32x128xf32>
      %c1_i32_118 = arith.constant 1 : i32
      %334 = tpu.dynamic_rotate %333 by %c1_i32_118 dim 1 : vector<32x128xf32>, i32 -> vector<32x128xf32>
      %335 = arith.maximumf %333, %334 : vector<32x128xf32>
      %c127_i32_119 = arith.constant 127 : i32
      %336 = tpu.dynamic_rotate %333 by %c127_i32_119 dim 1 : vector<32x128xf32>, i32 -> vector<32x128xf32>
      %337 = arith.maximumf %335, %336 : vector<32x128xf32>
      %c1_i32_120 = arith.constant 1 : i32
      %338 = tpu.dynamic_rotate %317 by %c1_i32_120 dim 0 : vector<32x128xf32>, i32 -> vector<32x128xf32>
      %339 = arith.maximumf %317, %338 : vector<32x128xf32>
      %c31_i32_121 = arith.constant 31 : i32
      %340 = tpu.dynamic_rotate %317 by %c31_i32_121 dim 0 : vector<32x128xf32>, i32 -> vector<32x128xf32>
      %341 = arith.maximumf %339, %340 : vector<32x128xf32>
      %c1_i32_122 = arith.constant 1 : i32
      %342 = tpu.dynamic_rotate %341 by %c1_i32_122 dim 1 : vector<32x128xf32>, i32 -> vector<32x128xf32>
      %343 = arith.maximumf %341, %342 : vector<32x128xf32>
      %c127_i32_123 = arith.constant 127 : i32
      %344 = tpu.dynamic_rotate %341 by %c127_i32_123 dim 1 : vector<32x128xf32>, i32 -> vector<32x128xf32>
      %345 = arith.maximumf %343, %344 : vector<32x128xf32>
      %cst_124 = arith.constant 5.000000e-01 : f32
      %346 = vector.broadcast %cst_124 : f32 to vector<32x128xf32>
      %347 = arith.cmpf ole, %337, %346 : vector<32x128xf32>
      %cst_125 = arith.constant 1.000000e+00 : f32
      %cst_126 = arith.constant 0.000000e+00 : f32
      %348 = vector.broadcast %cst_125 : f32 to vector<32x128xf32>
      %349 = vector.broadcast %cst_126 : f32 to vector<32x128xf32>
      %350 = arith.select %347, %348, %349 : vector<32x128xi1>, vector<32x128xf32>
      %351 = arith.addf %323, %350 : vector<32x128xf32>
      %cst_127 = arith.constant 5.000000e-01 : f32
      %352 = vector.broadcast %cst_127 : f32 to vector<32x128xf32>
      %353 = arith.cmpf ole, %345, %352 : vector<32x128xf32>
      %cst_128 = arith.constant 1.000000e+00 : f32
      %cst_129 = arith.constant 0.000000e+00 : f32
      %354 = vector.broadcast %cst_128 : f32 to vector<32x128xf32>
      %355 = vector.broadcast %cst_129 : f32 to vector<32x128xf32>
      %356 = arith.select %353, %354, %355 : vector<32x128xi1>, vector<32x128xf32>
      %357 = arith.addf %329, %356 : vector<32x128xf32>
      %c1_i32_130 = arith.constant 1 : i32
      %358 = tpu.dynamic_rotate %337 by %c1_i32_130 dim 0 : vector<32x128xf32>, i32 -> vector<32x128xf32>
      %359 = arith.maximumf %337, %358 : vector<32x128xf32>
      %c31_i32_131 = arith.constant 31 : i32
      %360 = tpu.dynamic_rotate %337 by %c31_i32_131 dim 0 : vector<32x128xf32>, i32 -> vector<32x128xf32>
      %361 = arith.maximumf %359, %360 : vector<32x128xf32>
      %c1_i32_132 = arith.constant 1 : i32
      %362 = tpu.dynamic_rotate %361 by %c1_i32_132 dim 1 : vector<32x128xf32>, i32 -> vector<32x128xf32>
      %363 = arith.maximumf %361, %362 : vector<32x128xf32>
      %c127_i32_133 = arith.constant 127 : i32
      %364 = tpu.dynamic_rotate %361 by %c127_i32_133 dim 1 : vector<32x128xf32>, i32 -> vector<32x128xf32>
      %365 = arith.maximumf %363, %364 : vector<32x128xf32>
      %c1_i32_134 = arith.constant 1 : i32
      %366 = tpu.dynamic_rotate %345 by %c1_i32_134 dim 0 : vector<32x128xf32>, i32 -> vector<32x128xf32>
      %367 = arith.maximumf %345, %366 : vector<32x128xf32>
      %c31_i32_135 = arith.constant 31 : i32
      %368 = tpu.dynamic_rotate %345 by %c31_i32_135 dim 0 : vector<32x128xf32>, i32 -> vector<32x128xf32>
      %369 = arith.maximumf %367, %368 : vector<32x128xf32>
      %c1_i32_136 = arith.constant 1 : i32
      %370 = tpu.dynamic_rotate %369 by %c1_i32_136 dim 1 : vector<32x128xf32>, i32 -> vector<32x128xf32>
      %371 = arith.maximumf %369, %370 : vector<32x128xf32>
      %c127_i32_137 = arith.constant 127 : i32
      %372 = tpu.dynamic_rotate %369 by %c127_i32_137 dim 1 : vector<32x128xf32>, i32 -> vector<32x128xf32>
      %373 = arith.maximumf %371, %372 : vector<32x128xf32>
      %cst_138 = arith.constant 5.000000e-01 : f32
      %374 = vector.broadcast %cst_138 : f32 to vector<32x128xf32>
      %375 = arith.cmpf ole, %365, %374 : vector<32x128xf32>
      %cst_139 = arith.constant 1.000000e+00 : f32
      %cst_140 = arith.constant 0.000000e+00 : f32
      %376 = vector.broadcast %cst_139 : f32 to vector<32x128xf32>
      %377 = vector.broadcast %cst_140 : f32 to vector<32x128xf32>
      %378 = arith.select %375, %376, %377 : vector<32x128xi1>, vector<32x128xf32>
      %379 = arith.addf %351, %378 : vector<32x128xf32>
      %cst_141 = arith.constant 5.000000e-01 : f32
      %380 = vector.broadcast %cst_141 : f32 to vector<32x128xf32>
      %381 = arith.cmpf ole, %373, %380 : vector<32x128xf32>
      %cst_142 = arith.constant 1.000000e+00 : f32
      %cst_143 = arith.constant 0.000000e+00 : f32
      %382 = vector.broadcast %cst_142 : f32 to vector<32x128xf32>
      %383 = vector.broadcast %cst_143 : f32 to vector<32x128xf32>
      %384 = arith.select %381, %382, %383 : vector<32x128xi1>, vector<32x128xf32>
      %385 = arith.addf %357, %384 : vector<32x128xf32>
      scf.yield %365, %379, %373, %385 : vector<32x128xf32>, vector<32x128xf32>, vector<32x128xf32>, vector<32x128xf32>
    }
    %c1_69 = arith.constant 1 : index
    %c0_70 = arith.constant 0 : index
    %c0_71 = arith.constant 0 : index
    %183 = vector.load %arg4[%c1_69, %c0_70, %c0_71] : memref<2x32x128xf32, #tpu.memory_space<vmem>>, vector<1x32x128xf32>
    %184 = vector.shape_cast %183 : vector<1x32x128xf32> to vector<32x128xf32>
    %cst_72 = arith.constant 5.000000e-01 : f32
    %185 = vector.broadcast %cst_72 : f32 to vector<32x128xf32>
    %186 = arith.cmpf ogt, %184, %185 : vector<32x128xf32>
    %cst_73 = arith.constant 0.000000e+00 : f32
    %187 = vector.broadcast %cst_73 : f32 to vector<32x128xf32>
    %188 = arith.select %186, %182#1, %187 : vector<32x128xi1>, vector<32x128xf32>
    %189 = vector.shape_cast %188 : vector<32x128xf32> to vector<1x32x128xf32>
    %cst_74 = arith.constant dense<0.000000e+00> : vector<1xf32>
    %190 = vector.multi_reduction <add>, %189, %cst_74 [1, 2] : vector<1x32x128xf32> to vector<1xf32>
    %191 = vector.shape_cast %190 : vector<1xf32> to vector<1x1x1xf32>
    %192 = vector.extract %191[0, 0, 0] : f32 from vector<1x1x1xf32>
    %c0_75 = arith.constant 0 : index
    %c0_76 = arith.constant 0 : index
    %c0_77 = arith.constant 0 : index
    %193 = vector.load %arg4[%c0_75, %c0_76, %c0_77] : memref<2x32x128xf32, #tpu.memory_space<vmem>>, vector<1x32x128xf32>
    %194 = vector.shape_cast %193 : vector<1x32x128xf32> to vector<32x128xf32>
    %cst_78 = arith.constant 5.000000e-01 : f32
    %195 = vector.broadcast %cst_78 : f32 to vector<32x128xf32>
    %196 = arith.cmpf ogt, %194, %195 : vector<32x128xf32>
    %cst_79 = arith.constant 0.000000e+00 : f32
    %197 = vector.broadcast %cst_79 : f32 to vector<32x128xf32>
    %198 = arith.select %196, %182#3, %197 : vector<32x128xi1>, vector<32x128xf32>
    %199 = vector.shape_cast %198 : vector<32x128xf32> to vector<1x32x128xf32>
    %cst_80 = arith.constant dense<0.000000e+00> : vector<1xf32>
    %200 = vector.multi_reduction <add>, %199, %cst_80 [1, 2] : vector<1x32x128xf32> to vector<1xf32>
    %201 = vector.shape_cast %200 : vector<1xf32> to vector<1x1x1xf32>
    %202 = vector.extract %201[0, 0, 0] : f32 from vector<1x1x1xf32>
    %203 = tpu.iota {dimensions = array<i32: 1>} : vector<1x128xi32>
    %c0_i32_81 = arith.constant 0 : i32
    %204 = vector.broadcast %c0_i32_81 : i32 to vector<1x128xi32>
    %205 = arith.cmpi eq, %203, %204 : vector<1x128xi32>
    %cst_82 = arith.constant 0.000000e+00 : f32
    %206 = vector.broadcast %18 : f32 to vector<1x128xf32>
    %207 = vector.broadcast %cst_82 : f32 to vector<1x128xf32>
    %208 = arith.select %205, %206, %207 : vector<1x128xi1>, vector<1x128xf32>
    %c1_i32_83 = arith.constant 1 : i32
    %209 = vector.broadcast %c1_i32_83 : i32 to vector<1x128xi32>
    %210 = arith.cmpi eq, %203, %209 : vector<1x128xi32>
    %cst_84 = arith.constant 0.000000e+00 : f32
    %211 = vector.broadcast %22 : f32 to vector<1x128xf32>
    %212 = vector.broadcast %cst_84 : f32 to vector<1x128xf32>
    %213 = arith.select %210, %211, %212 : vector<1x128xi1>, vector<1x128xf32>
    %c2_i32 = arith.constant 2 : i32
    %214 = vector.broadcast %c2_i32 : i32 to vector<1x128xi32>
    %215 = arith.cmpi eq, %203, %214 : vector<1x128xi32>
    %cst_85 = arith.constant 0.000000e+00 : f32
    %216 = vector.broadcast %26 : f32 to vector<1x128xf32>
    %217 = vector.broadcast %cst_85 : f32 to vector<1x128xf32>
    %218 = arith.select %215, %216, %217 : vector<1x128xi1>, vector<1x128xf32>
    %c3_i32_86 = arith.constant 3 : i32
    %219 = vector.broadcast %c3_i32_86 : i32 to vector<1x128xi32>
    %220 = arith.cmpi eq, %203, %219 : vector<1x128xi32>
    %cst_87 = arith.constant 0.000000e+00 : f32
    %221 = vector.broadcast %107 : f32 to vector<1x128xf32>
    %222 = vector.broadcast %cst_87 : f32 to vector<1x128xf32>
    %223 = arith.select %220, %221, %222 : vector<1x128xi1>, vector<1x128xf32>
    %c4_i32 = arith.constant 4 : i32
    %224 = vector.broadcast %c4_i32 : i32 to vector<1x128xi32>
    %225 = arith.cmpi eq, %203, %224 : vector<1x128xi32>
    %cst_88 = arith.constant 0.000000e+00 : f32
    %226 = vector.broadcast %111 : f32 to vector<1x128xf32>
    %227 = vector.broadcast %cst_88 : f32 to vector<1x128xf32>
    %228 = arith.select %225, %226, %227 : vector<1x128xi1>, vector<1x128xf32>
    %c5_i32 = arith.constant 5 : i32
    %229 = vector.broadcast %c5_i32 : i32 to vector<1x128xi32>
    %230 = arith.cmpi eq, %203, %229 : vector<1x128xi32>
    %cst_89 = arith.constant 0.000000e+00 : f32
    %231 = vector.broadcast %115 : f32 to vector<1x128xf32>
    %232 = vector.broadcast %cst_89 : f32 to vector<1x128xf32>
    %233 = arith.select %230, %231, %232 : vector<1x128xi1>, vector<1x128xf32>
    %c6_i32 = arith.constant 6 : i32
    %234 = vector.broadcast %c6_i32 : i32 to vector<1x128xi32>
    %235 = arith.cmpi eq, %203, %234 : vector<1x128xi32>
    %cst_90 = arith.constant 0.000000e+00 : f32
    %236 = vector.broadcast %124 : f32 to vector<1x128xf32>
    %237 = vector.broadcast %cst_90 : f32 to vector<1x128xf32>
    %238 = arith.select %235, %236, %237 : vector<1x128xi1>, vector<1x128xf32>
    %c7_i32 = arith.constant 7 : i32
    %239 = vector.broadcast %c7_i32 : i32 to vector<1x128xi32>
    %240 = arith.cmpi eq, %203, %239 : vector<1x128xi32>
    %cst_91 = arith.constant 0.000000e+00 : f32
    %241 = vector.broadcast %128 : f32 to vector<1x128xf32>
    %242 = vector.broadcast %cst_91 : f32 to vector<1x128xf32>
    %243 = arith.select %240, %241, %242 : vector<1x128xi1>, vector<1x128xf32>
    %c8_i32 = arith.constant 8 : i32
    %244 = vector.broadcast %c8_i32 : i32 to vector<1x128xi32>
    %245 = arith.cmpi eq, %203, %244 : vector<1x128xi32>
    %cst_92 = arith.constant 0.000000e+00 : f32
    %246 = vector.broadcast %132 : f32 to vector<1x128xf32>
    %247 = vector.broadcast %cst_92 : f32 to vector<1x128xf32>
    %248 = arith.select %245, %246, %247 : vector<1x128xi1>, vector<1x128xf32>
    %c9_i32 = arith.constant 9 : i32
    %249 = vector.broadcast %c9_i32 : i32 to vector<1x128xi32>
    %250 = arith.cmpi eq, %203, %249 : vector<1x128xi32>
    %cst_93 = arith.constant 0.000000e+00 : f32
    %251 = vector.broadcast %141 : f32 to vector<1x128xf32>
    %252 = vector.broadcast %cst_93 : f32 to vector<1x128xf32>
    %253 = arith.select %250, %251, %252 : vector<1x128xi1>, vector<1x128xf32>
    %c10_i32 = arith.constant 10 : i32
    %254 = vector.broadcast %c10_i32 : i32 to vector<1x128xi32>
    %255 = arith.cmpi eq, %203, %254 : vector<1x128xi32>
    %cst_94 = arith.constant 0.000000e+00 : f32
    %256 = vector.broadcast %145 : f32 to vector<1x128xf32>
    %257 = vector.broadcast %cst_94 : f32 to vector<1x128xf32>
    %258 = arith.select %255, %256, %257 : vector<1x128xi1>, vector<1x128xf32>
    %c11_i32 = arith.constant 11 : i32
    %259 = vector.broadcast %c11_i32 : i32 to vector<1x128xi32>
    %260 = arith.cmpi eq, %203, %259 : vector<1x128xi32>
    %cst_95 = arith.constant 0.000000e+00 : f32
    %261 = vector.broadcast %149 : f32 to vector<1x128xf32>
    %262 = vector.broadcast %cst_95 : f32 to vector<1x128xf32>
    %263 = arith.select %260, %261, %262 : vector<1x128xi1>, vector<1x128xf32>
    %c12_i32 = arith.constant 12 : i32
    %264 = vector.broadcast %c12_i32 : i32 to vector<1x128xi32>
    %265 = arith.cmpi eq, %203, %264 : vector<1x128xi32>
    %cst_96 = arith.constant 0.000000e+00 : f32
    %266 = vector.broadcast %192 : f32 to vector<1x128xf32>
    %267 = vector.broadcast %cst_96 : f32 to vector<1x128xf32>
    %268 = arith.select %265, %266, %267 : vector<1x128xi1>, vector<1x128xf32>
    %c13_i32 = arith.constant 13 : i32
    %269 = vector.broadcast %c13_i32 : i32 to vector<1x128xi32>
    %270 = arith.cmpi eq, %203, %269 : vector<1x128xi32>
    %cst_97 = arith.constant 0.000000e+00 : f32
    %271 = vector.broadcast %158 : f32 to vector<1x128xf32>
    %272 = vector.broadcast %cst_97 : f32 to vector<1x128xf32>
    %273 = arith.select %270, %271, %272 : vector<1x128xi1>, vector<1x128xf32>
    %c14_i32 = arith.constant 14 : i32
    %274 = vector.broadcast %c14_i32 : i32 to vector<1x128xi32>
    %275 = arith.cmpi eq, %203, %274 : vector<1x128xi32>
    %cst_98 = arith.constant 0.000000e+00 : f32
    %276 = vector.broadcast %202 : f32 to vector<1x128xf32>
    %277 = vector.broadcast %cst_98 : f32 to vector<1x128xf32>
    %278 = arith.select %275, %276, %277 : vector<1x128xi1>, vector<1x128xf32>
    %c15_i32_99 = arith.constant 15 : i32
    %279 = vector.broadcast %c15_i32_99 : i32 to vector<1x128xi32>
    %280 = arith.cmpi eq, %203, %279 : vector<1x128xi32>
    %cst_100 = arith.constant 0.000000e+00 : f32
    %281 = vector.broadcast %167 : f32 to vector<1x128xf32>
    %282 = vector.broadcast %cst_100 : f32 to vector<1x128xf32>
    %283 = arith.select %280, %281, %282 : vector<1x128xi1>, vector<1x128xf32>
    %284 = arith.addf %208, %213 : vector<1x128xf32>
    %285 = arith.addf %218, %223 : vector<1x128xf32>
    %286 = arith.addf %228, %233 : vector<1x128xf32>
    %287 = arith.addf %238, %243 : vector<1x128xf32>
    %288 = arith.addf %248, %253 : vector<1x128xf32>
    %289 = arith.addf %258, %263 : vector<1x128xf32>
    %290 = arith.addf %268, %273 : vector<1x128xf32>
    %291 = arith.addf %278, %283 : vector<1x128xf32>
    %292 = arith.addf %284, %285 : vector<1x128xf32>
    %293 = arith.addf %286, %287 : vector<1x128xf32>
    %294 = arith.addf %288, %289 : vector<1x128xf32>
    %295 = arith.addf %290, %291 : vector<1x128xf32>
    %296 = arith.addf %292, %293 : vector<1x128xf32>
    %297 = arith.addf %294, %295 : vector<1x128xf32>
    %298 = arith.addf %296, %297 : vector<1x128xf32>
    %c0_101 = arith.constant 0 : index
    %c0_102 = arith.constant 0 : index
    %c0_103 = arith.constant 0 : index
    %299 = vector.load %arg3[%c0_101, %c0_102, %c0_103] : memref<1x1x128xf32, #tpu.memory_space<vmem>>, vector<1x1x128xf32>
    %300 = vector.shape_cast %299 : vector<1x1x128xf32> to vector<1x128xf32>
    %301 = vector.shape_cast %298 : vector<1x128xf32> to vector<1x1x128xf32>
    tpu.vector_store %arg3[%c0_101, %c0_102, %c0_103], %301 {strides = array<i32>} : memref<1x1x128xf32, #tpu.memory_space<vmem>>, vector<1x1x128xf32>,
    return
  }
  func.func @transform_0(%arg0: i32) -> (i32, i32, i32, i32) {
    %c0_i32 = arith.constant 0 : i32
    %c0_i32_0 = arith.constant 0 : i32
    %c0_i32_1 = arith.constant 0 : i32
    %c0_i32_2 = arith.constant 0 : i32
    return %arg0, %c0_i32, %c0_i32_0, %c0_i32_1 : i32, i32, i32, i32
  }
  func.func @transform_1(%arg0: i32) -> (i32, i32, i32, i32) {
    %c0_i32 = arith.constant 0 : i32
    %c0_i32_0 = arith.constant 0 : i32
    %c0_i32_1 = arith.constant 0 : i32
    %c0_i32_2 = arith.constant 0 : i32
    return %arg0, %c0_i32, %c0_i32_0, %c0_i32_1 : i32, i32, i32, i32
  }
  func.func @transform_2(%arg0: i32) -> (i32, i32, i32) {
    %c0_i32 = arith.constant 0 : i32
    %c0_i32_0 = arith.constant 0 : i32
    %c0_i32_1 = arith.constant 0 : i32
    return %arg0, %c0_i32, %c0_i32_0 : i32, i32, i32
  }
}

</mosaic_0001>

<llo_original>
// kernel: adaptive_skeleton_loss.1
$region0: #{adaptive_skeleton_loss.1}
  #allocation0 [shape = 'u32[]', space=smem, size = 0x4, offset = 0x4, fixed_abs, tag = 'smem constant byte address 0x4 - core index']
  #allocation1 [shape = 'u32[144,128]{1,0:T(1,128)}', space=vmem, size = 0x12000, scoped, tag = 'internal scratch']
  #allocation2 [shape = 'f32[2,32,128]{2,1,0:T(8,128)}', space=vmem, size = 0x8000, scoped, tag = 'scratch operand']
  %s0 = inlined_call_operand.hbm [shape: f32[2,1,16,16], index: 0, kind: input, shape index: {}]
  %s1 = inlined_call_operand.hbm [shape: f32[2,1,16,16], index: 1, kind: input, shape index: {}]
  %s2 = inlined_call_operand.vmem [shape: f32[2,1,128], index: 2, kind: output, shape index: {}]
  %s3 = sld [smem:[#allocation0]]
  $region56: #{adaptive_skeleton_loss.1} parent=0
    _
  %s5 = ssub.s32 1, %s3
  %s6 = scalar_select 0, %s5, %s3
  $region1: #{adaptive_skeleton_loss.1} parent=0
    #allocation3 [shape = 'u8[16384]{0}', space=vmem, size = 0x4000, scoped, tag = 'input window, operand 0']
    #allocation4 [shape = 's32[2]{0}', space=sflag, size = 0x8, scoped, tag = 'scoped memory for adaptive_skeleton_loss.1']
    #allocation5 [shape = 'u8[16384]{0}', space=vmem, size = 0x4000, scoped, tag = 'input window, operand 1']
    #allocation6 [shape = 's32[2]{0}', space=sflag, size = 0x8, scoped, tag = 'scoped memory for adaptive_skeleton_loss.1']
    %7 = vsyncpa [#allocation4], 0
    %s8 = scalar_lea.sflag [#allocation4], 1
    %9 = vsyncpa %s8, 0
    %10 = vsyncpa [#allocation6], 0
    %s11 = scalar_lea.sflag [#allocation6], 1
    %12 = vsyncpa %s11, 0
    loop: start=0, step=1, limit=4
    $region2: #{adaptive_skeleton_loss.1} parent=1 // loop_pre_header
      _
    $region3: #{adaptive_skeleton_loss.1} parent=1 // loop_header
      %s14 = sphi 0, %s18
      %p15 = scmp.ge.s32.totalorder %s14, 4
      %s24 = sphi 0, %s26
      %s27 = sphi 0, %s24
      %s28 = sphi 0, %s27
      %s44 = sphi 0, %s28
      %s50 = sphi 0, %s52
      %s53 = sphi 0, %s50
      %s54 = sphi 0, %s53
      %s70 = sphi 0, %s54
      %s76 = sphi 0, %s78
      %s79 = sphi 0, %s76
      %s80 = sphi 0, %s79
      %s96 = sphi 0, %s80
    $region4: #{adaptive_skeleton_loss.1} parent=1 // loop_header_branch
      %17 = sbr.rel (%p15) target = $region8
    $region5: #{adaptive_skeleton_loss.1} parent=1 // loop_body
      %s19 = ssub.s32 %s14, 1
      %s20 = ssub.s32 %s14, 2
      %s21 = sadd.s32 %s14, 1
      %s22 = ssub.s32 %s14, %s21
      %p23 = scmp.eq.s32.totalorder %s22, 0
      %s25 = sadd.s32 %s24, 1
      %s26 = scalar_select %p23, %s24, %s25
      %p29 = pneg %p23
      %p30 = scmp.eq.s32.totalorder %s14, 1
      %p31 = por %p29, %p30
      %p32 = scmp.ne.s32.totalorder %s24, %s27
      %p33 = scmp.eq.s32.totalorder %s14, 0
      %p34 = por %p32, %p33
      %p35 = scmp.ne.s32.totalorder %s24, %s27
      %p36 = scmp.eq.s32.totalorder %s19, 1
      %p37 = por %p35, %p36
      %p38 = scmp.ne.s32.totalorder %s27, %s28
      %p39 = scmp.eq.s32.totalorder %s19, 0
      %p40 = por %p38, %p39
      %p41 = scmp.ne.s32.totalorder %s27, %s28
      %p42 = scmp.eq.s32.totalorder %s20, 1
      %p43 = por %p41, %p42
      %p45 = scmp.ne.s32.totalorder %s28, %s44
      %p46 = scmp.eq.s32.totalorder %s20, 0
      %p47 = por %p45, %p46
      %s48 = ssub.s32 %s14, %s21
      %p49 = scmp.eq.s32.totalorder %s48, 0
      %s51 = sadd.s32 %s50, 1
      %s52 = scalar_select %p49, %s50, %s51
      %p55 = pneg %p49
      %p56 = scmp.eq.s32.totalorder %s14, 1
      %p57 = por %p55, %p56
      %p58 = scmp.ne.s32.totalorder %s50, %s53
      %p59 = scmp.eq.s32.totalorder %s14, 0
      %p60 = por %p58, %p59
      %p61 = scmp.ne.s32.totalorder %s50, %s53
      %p62 = scmp.eq.s32.totalorder %s19, 1
      %p63 = por %p61, %p62
      %p64 = scmp.ne.s32.totalorder %s53, %s54
      %p65 = scmp.eq.s32.totalorder %s19, 0
      %p66 = por %p64, %p65
      %p67 = scmp.ne.s32.totalorder %s53, %s54
      %p68 = scmp.eq.s32.totalorder %s20, 1
      %p69 = por %p67, %p68
      %p71 = scmp.ne.s32.totalorder %s54, %s70
      %p72 = scmp.eq.s32.totalorder %s20, 0
      %p73 = por %p71, %p72
      %s74 = ssub.s32 %s14, %s21
      %p75 = scmp.eq.s32.totalorder %s74, 0
      %s77 = sadd.s32 %s76, 1
      %s78 = scalar_select %p75, %s76, %s77
      %p81 = pneg %p75
      %p82 = scmp.eq.s32.totalorder %s14, 1
      %p83 = por %p81, %p82
      %p84 = scmp.ne.s32.totalorder %s76, %s79
      %p85 = scmp.eq.s32.totalorder %s14, 0
      %p86 = por %p84, %p85
      %p87 = scmp.ne.s32.totalorder %s76, %s79
      %p88 = scmp.eq.s32.totalorder %s19, 1
      %p89 = por %p87, %p88
      %p90 = scmp.ne.s32.totalorder %s79, %s80
      %p91 = scmp.eq.s32.totalorder %s19, 0
      %p92 = por %p90, %p91
      %p93 = scmp.ne.s32.totalorder %s79, %s80
      %p94 = scmp.eq.s32.totalorder %s20, 1
      %p95 = por %p93, %p94
      %p97 = scmp.ne.s32.totalorder %s80, %s96
      %p98 = scmp.eq.s32.totalorder %s20, 0
      %p99 = por %p97, %p98
      %p100 = scmp.le.s32.totalorder 1, %s14
      %p101 = scmp.lt.s32.totalorder %s14, 3
      %p102 = pnand %p100, %p101
      %p103 = pneg %p102
      // Predicated region
      $region9: #{adaptive_skeleton_loss.1} parent=5 // pred_check
        _
      $region10: #{adaptive_skeleton_loss.1} parent=5 // pred_check_branch
        %105 = sbr.rel (%p102) target = $region12
      $region11: #{adaptive_skeleton_loss.1} parent=5 // pred_region
        %s106 = ssub.s32 %s14, 1
      $region12: #{adaptive_skeleton_loss.1} parent=5 // pred_fallthru
        _
      %p107 = scmp.lt.s32.totalorder %s14, 2
      // Predicated region
      $region13: #{adaptive_skeleton_loss.1} parent=5 // pred_check
        %p108 = pneg %p107
      $region14: #{adaptive_skeleton_loss.1} parent=5 // pred_check_branch
        %110 = sbr.rel (%p108) target = $region16
      $region15: #{adaptive_skeleton_loss.1} parent=5 // pred_region
        // Predicated region
        $region17: #{adaptive_skeleton_loss.1} parent=15 // pred_check
          %p111 = pneg %p34
        $region18: #{adaptive_skeleton_loss.1} parent=15 // pred_check_branch
          %113 = sbr.rel (%p111) target = $region20
        $region19: #{adaptive_skeleton_loss.1} parent=15 // pred_region
          %s114 = sand.u32 %s24, 1
          %s115 = scalar_lea.sflag [#allocation4], %s114
          %s116 = sand.u32 %s24, 1
          %s117 = smul.addr %s116, 16
          %s118 = scalar_lea.vmem [#allocation3], %s117
          %s120 = ssub.s32 256, 256
          %121 = vsyncadd %s115, %s120
          %s122 = smul.addr %s14, 2
          %s123 = smul.addr %s122, 128
          %s124 = scalar_lea.hbm %s0, %s123
          %s125 = sshll.u32 %s118, 4
          %s126 = int_to_ptr.vmem [resolvable:$true] %s125
          %131 = dma.hbm_to_vmem [thread:$0]  %s124, 256, %s126, %s115, 128, 128, 8
        $region20: #{adaptive_skeleton_loss.1} parent=15 // pred_fallthru
          _
        // Predicated region
        $region21: #{adaptive_skeleton_loss.1} parent=15 // pred_check
          %p132 = pneg %p60
        $region22: #{adaptive_skeleton_loss.1} parent=15 // pred_check_branch
          %134 = sbr.rel (%p132) target = $region24
        $region23: #{adaptive_skeleton_loss.1} parent=15 // pred_region
          %s135 = sand.u32 %s50, 1
          %s136 = scalar_lea.sflag [#allocation6], %s135
          %s137 = sand.u32 %s50, 1
          %s138 = smul.addr %s137, 16
          %s139 = scalar_lea.vmem [#allocation5], %s138
          %s141 = ssub.s32 256, 256
          %142 = vsyncadd %s136, %s141
          %s143 = smul.addr %s14, 2
          %s144 = smul.addr %s143, 128
          %s145 = scalar_lea.hbm %s1, %s144
          %s146 = sshll.u32 %s139, 4
          %s147 = int_to_ptr.vmem [resolvable:$true] %s146
          %152 = dma.hbm_to_vmem [thread:$0]  %s145, 256, %s147, %s136, 128, 128, 8
        $region24: #{adaptive_skeleton_loss.1} parent=15 // pred_fallthru
          _
      $region16: #{adaptive_skeleton_loss.1} parent=5 // pred_fallthru
        _
      %p153 = scmp.le.s32.totalorder 1, %s14
      %p154 = scmp.lt.s32.totalorder %s14, 3
      %p155 = pnand %p153, %p154
      %p156 = pneg %p155
      // Predicated region
      $region25: #{adaptive_skeleton_loss.1} parent=5 // pred_check
        _
      $region26: #{adaptive_skeleton_loss.1} parent=5 // pred_check_branch
        %158 = sbr.rel (%p155) target = $region28
      $region27: #{adaptive_skeleton_loss.1} parent=5 // pred_region
        %s159 = ssub.s32 %s14, 1
        %s160 = sand.u32 %s27, 1
        %s161 = scalar_lea.sflag [#allocation4], %s160
        %s162 = sand.u32 %s27, 1
        %s163 = smul.addr %s162, 16
        %s164 = scalar_lea.vmem [#allocation3], %s163
        // Predicated region
        $region29: #{adaptive_skeleton_loss.1} parent=27 // pred_check
          %p165 = pneg %p40
        $region30: #{adaptive_skeleton_loss.1} parent=27 // pred_check_branch
          %167 = sbr.rel (%p165) target = $region32
        $region31: #{adaptive_skeleton_loss.1} parent=27 // pred_region
          %168 = dma.done %s161, 256
        $region32: #{adaptive_skeleton_loss.1} parent=27 // pred_fallthru
          _
        %s169 = sand.u32 %s53, 1
        %s170 = scalar_lea.sflag [#allocation6], %s169
        %s171 = sand.u32 %s53, 1
        %s172 = smul.addr %s171, 16
        %s173 = scalar_lea.vmem [#allocation5], %s172
        // Predicated region
        $region33: #{adaptive_skeleton_loss.1} parent=27 // pred_check
          %p174 = pneg %p66
        $region34: #{adaptive_skeleton_loss.1} parent=27 // pred_check_branch
          %176 = sbr.rel (%p174) target = $region36
        $region35: #{adaptive_skeleton_loss.1} parent=27 // pred_region
          %177 = dma.done %s170, 256
        $region36: #{adaptive_skeleton_loss.1} parent=27 // pred_fallthru
          _
        %s178 = sand.u32 %s27, 1
        %s179 = scalar_lea.sflag [#allocation4], %s178
        %s180 = sand.u32 %s27, 1
        %s181 = smul.addr %s180, 16
        %s182 = scalar_lea.vmem [#allocation3], %s181
        %p183 = pneg %p40
        %p184 = pneg %p37
        %s185 = sand.u32 %s53, 1
        %s186 = scalar_lea.sflag [#allocation6], %s185
        %s187 = sand.u32 %s53, 1
        %s188 = smul.addr %s187, 16
        %s189 = scalar_lea.vmem [#allocation5], %s188
        %p190 = pneg %p66
        %p191 = pneg %p63
        %p192 = pneg %p92
        %p193 = pneg %p89
        %p194 = scmp.lt.s32.totalorder %s19, 1
        %s195 = scalar_select %p194, %s19, 1
        %s196 = scalar_lea.vmem %s2, %s195
        %p197 = scmp.lt.s32.totalorder %s19, 1
        %s198 = scalar_select %p197, %s19, 1
        %s199 = scalar_lea.vmem %s2, %s198
        %v200 = vld [vmem:[%s164] sm:$0xff]
        %v201 = vld [vmem:[%s164 + $0x8] sm:$0xff]
        %v202 = vld [vmem:[%s173] sm:$0xff]
        %v203 = vld [vmem:[%s173 + $0x8] sm:$0xff]
        %v204 = vlaneseq
        %v205 = vshrl.u32 %v204, 7
        %v206 = vadd.s32 %v205, 8
        %v207 = vlaneseq
        %v208 = vand.u32 %v207, 127
        %vm209 = vcmp.lt.s32.totalorder %v205, 15
        %vm210 = vcmp.lt.s32.totalorder %v206, 15
        %vm211 = vcmp.ge.s32.totalorder %v205, 1
        %vm212 = vcmp.ge.s32.totalorder %v206, 1
        %vm213 = vcmp.lt.s32.totalorder %v208, 15
        %vm214 = vcmp.ge.s32.totalorder %v208, 1
        %v215 = vmul.f32 %v200, %v202
        %v216 = vmul.f32 %v201, %v203
        %vm217 = vcmask 130048
        %v218 = vsel %vm217, %v215, 0.0
        %v219 = vsel %vm217, %v216, 0.0
        %v220 = vadd.f32 %v218, %v219
        %221 = vadd.xlane.f32.xlu0 %v220
        %v222 = vpop.xlane.xlu0 %221
        %v223 = vrot.slane %v222, 4
        %v224 = vadd.f32 %v222, %v223
        %v225 = vrot.slane %v224, 2
        %v226 = vadd.f32 %v224, %v225
        %v227 = vrot.slane %v226, 1
        %v228 = vadd.f32 %v226, %v227
        %s229 = vtos %v228
        %v230 = vsel %vm217, %v200, 0.0
        %v231 = vsel %vm217, %v201, 0.0
        %v232 = vadd.f32 %v230, %v231
        %233 = vadd.xlane.f32.xlu0 %v232
        %v234 = vpop.xlane.xlu0 %233
        %v235 = vrot.slane %v234, 4
        %v236 = vadd.f32 %v234, %v235
        %v237 = vrot.slane %v236, 2
        %v238 = vadd.f32 %v236, %v237
        %v239 = vrot.slane %v238, 1
        %v240 = vadd.f32 %v238, %v239
        %s241 = vtos %v240
        %v242 = vsel %vm217, %v202, 0.0
        %v243 = vsel %vm217, %v203, 0.0
        %v244 = vadd.f32 %v242, %v243
        %245 = vadd.xlane.f32.xlu0 %v244
        %v246 = vpop.xlane.xlu0 %245
        %v247 = vrot.slane %v246, 4
        %v248 = vadd.f32 %v246, %v247
        %v249 = vrot.slane %v248, 2
        %v250 = vadd.f32 %v248, %v249
        %v251 = vrot.slane %v250, 1
        %v252 = vadd.f32 %v250, %v251
        %s253 = vtos %v252
        %vm254 = vcmask 1047680
        %255 = vrot.lane.b32.xlu0 %v200, 16
        %v256 = vpop.permute.xlu0 %255
        %v257 = vsel %vm254, %v256, %v200
        %258 = vrot.lane.b32.xlu0 %v201, 16
        %v259 = vpop.permute.xlu0 %258
        %v260 = vsel %vm254, %v259, %v201
        %261 = vrot.lane.b32.xlu0 %v257, 16
        %v262 = vpop.permute.xlu0 %261
        %263 = vrot.lane.b32.xlu0 %v260, 16
        %v264 = vpop.permute.xlu0 %263
        %v265 = vsel %vm254, %v262, %v200
        %v266 = vsel %vm254, %v264, %v201
        %v267 = vsel %vm213, 1, 0
        %vm268 = vcmp.eq.s32.totalorder %v267, 1
        %271 = vrot.lane.b32.xlu0 %v265, 127
        %v272 = vpop.permute.xlu0 %271
        %273 = vrot.lane.b32.xlu0 %v266, 127
        %v274 = vpop.permute.xlu0 %273
        %v277 = vsel %vm268, %v272, 0.0
        %v278 = vsel %vm268, %v274, 0.0
        %v279 = vadd.f32 %v200, %v277
        %v280 = vadd.f32 %v201, %v278
        %v281 = vsel %vm214, 1, 0
        %vm282 = vcmp.eq.s32.totalorder %v281, 1
        %283 = vrot.lane.b32.xlu0 %v265, 113
        %v284 = vpop.permute.xlu0 %283
        %285 = vrot.lane.b32.xlu0 %v266, 113
        %v286 = vpop.permute.xlu0 %285
        %v289 = vsel %vm282, %v284, 0.0
        %v290 = vsel %vm282, %v286, 0.0
        %v291 = vadd.f32 %v279, %v289
        %v292 = vadd.f32 %v280, %v290
        %v293 = vrot.slane %v291, 1
        %v294 = vrot.slane %v292, 1
        %vm295 = vcmp.lt.s32.totalorder %v205, 7
        %v296 = vsel %vm295, %v293, %v294
        %v297 = vsel %vm295, %v294, %v293
        %v298 = vsel %vm209, 1, 0
        %v299 = vsel %vm210, 1, 0
        %vm300 = vcmp.eq.s32.totalorder %v298, 1
        %vm301 = vcmp.eq.s32.totalorder %v299, 1
        %v302 = vsel %vm300, %v296, 0.0
        %v303 = vsel %vm301, %v297, 0.0
        %v304 = vadd.f32 %v291, %v302
        %v305 = vadd.f32 %v292, %v303
        %v306 = vrot.slane %v291, 7
        %v307 = vrot.slane %v292, 7
        %vm308 = vcmp.lt.s32.totalorder %v205, 1
        %v309 = vsel %vm308, %v306, %v307
        %v310 = vsel %vm308, %v307, %v306
        %v311 = vsel %vm211, 1, 0
        %v312 = vsel %vm212, 1, 0
        %vm313 = vcmp.eq.s32.totalorder %v311, 1
        %vm314 = vcmp.eq.s32.totalorder %v312, 1
        %v315 = vsel %vm313, %v310, 0.0
        %v316 = vsel %vm314, %v309, 0.0
        %v317 = vadd.f32 %v304, %v315
        %v318 = vadd.f32 %v305, %v316
        %v319 = vsub.f32 %v317, %v200
        %v320 = vsub.f32 %v318, %v201
        %vm321 = vcmp.gt.f32.partialorder %v200, 0.5
        %vm322 = vcmp.gt.f32.partialorder %v201, 0.5
        %vm323 = vcmp.eq.f32.partialorder %v319, 1.0
        %vm324 = vcmp.eq.f32.partialorder %v320, 1.0
        %vm325 = vmand %vm323, %vm321
        %vm326 = vmand %vm324, %vm322
        %vm327 = vcmp.eq.f32.partialorder %v319, 2.0
        %vm328 = vcmp.eq.f32.partialorder %v320, 2.0
        %vm329 = vmand %vm327, %vm321
        %vm330 = vmand %vm328, %vm322
        %vm331 = vcmp.gt.f32.partialorder %v319, 2.0
        %vm332 = vcmp.gt.f32.partialorder %v320, 2.0
        %vm333 = vmand %vm331, %vm321
        %vm334 = vmand %vm332, %vm322
        %335 = vrot.lane.b32.xlu0 %v202, 16
        %v336 = vpop.permute.xlu0 %335
        %v337 = vsel %vm254, %v336, %v202
        %338 = vrot.lane.b32.xlu0 %v203, 16
        %v339 = vpop.permute.xlu0 %338
        %v340 = vsel %vm254, %v339, %v203
        %341 = vrot.lane.b32.xlu0 %v337, 16
        %v342 = vpop.permute.xlu0 %341
        %343 = vrot.lane.b32.xlu0 %v340, 16
        %v344 = vpop.permute.xlu0 %343
        %v345 = vsel %vm254, %v342, %v202
        %v346 = vsel %vm254, %v344, %v203
        %349 = vrot.lane.b32.xlu0 %v345, 127
        %v350 = vpop.permute.xlu0 %349
        %351 = vrot.lane.b32.xlu0 %v346, 127
        %v352 = vpop.permute.xlu0 %351
        %v355 = vsel %vm268, %v350, 0.0
        %v356 = vsel %vm268, %v352, 0.0
        %v357 = vadd.f32 %v202, %v355
        %v358 = vadd.f32 %v203, %v356
        %359 = vrot.lane.b32.xlu0 %v345, 113
        %v360 = vpop.permute.xlu0 %359
        %361 = vrot.lane.b32.xlu0 %v346, 113
        %v362 = vpop.permute.xlu0 %361
        %v365 = vsel %vm282, %v360, 0.0
        %v366 = vsel %vm282, %v362, 0.0
        %v367 = vadd.f32 %v357, %v365
        %v368 = vadd.f32 %v358, %v366
        %v369 = vrot.slane %v367, 1
        %v370 = vrot.slane %v368, 1
        %v371 = vsel %vm295, %v369, %v370
        %v372 = vsel %vm295, %v370, %v369
        %v373 = vsel %vm300, %v371, 0.0
        %v374 = vsel %vm301, %v372, 0.0
        %v375 = vadd.f32 %v367, %v373
        %v376 = vadd.f32 %v368, %v374
        %v377 = vrot.slane %v367, 7
        %v378 = vrot.slane %v368, 7
        %v379 = vsel %vm308, %v377, %v378
        %v380 = vsel %vm308, %v378, %v377
        %v381 = vsel %vm313, %v380, 0.0
        %v382 = vsel %vm314, %v379, 0.0
        %v383 = vadd.f32 %v375, %v381
        %v384 = vadd.f32 %v376, %v382
        %v385 = vsub.f32 %v383, %v202
        %v386 = vsub.f32 %v384, %v203
        %vm387 = vcmp.gt.f32.partialorder %v202, 0.5
        %vm388 = vcmp.gt.f32.partialorder %v203, 0.5
        %vm389 = vcmp.eq.f32.partialorder %v385, 1.0
        %vm390 = vcmp.eq.f32.partialorder %v386, 1.0
        %vm391 = vmand %vm389, %vm387
        %vm392 = vmand %vm390, %vm388
        %vm393 = vcmp.eq.f32.partialorder %v385, 2.0
        %vm394 = vcmp.eq.f32.partialorder %v386, 2.0
        %vm395 = vmand %vm393, %vm387
        %vm396 = vmand %vm394, %vm388
        %vm397 = vcmp.gt.f32.partialorder %v385, 2.0
        %vm398 = vcmp.gt.f32.partialorder %v386, 2.0
        %vm399 = vmand %vm397, %vm387
        %vm400 = vmand %vm398, %vm388
        %v401 = vsel %vm325, 1, 0
        %v402 = vsel %vm326, 1, 0
        %v403 = vcvt.s32.f32 %v401
        %v404 = vcvt.s32.f32 %v402
        %v405 = vsel %vm391, 1, 0
        %v406 = vsel %vm392, 1, 0
        %v407 = vcvt.s32.f32 %v405
        %v408 = vcvt.s32.f32 %v406
        %v409 = vmul.f32 %v403, %v407
        %v410 = vmul.f32 %v404, %v408
        %v411 = vsel %vm217, %v409, 0.0
        %v412 = vsel %vm217, %v410, 0.0
        %v413 = vadd.f32 %v411, %v412
        %414 = vadd.xlane.f32.xlu0 %v413
        %v415 = vpop.xlane.xlu0 %414
        %v416 = vrot.slane %v415, 4
        %v417 = vadd.f32 %v415, %v416
        %v418 = vrot.slane %v417, 2
        %v419 = vadd.f32 %v417, %v418
        %v420 = vrot.slane %v419, 1
        %v421 = vadd.f32 %v419, %v420
        %s422 = vtos %v421
        %v423 = vsel %vm217, %v403, 0.0
        %v424 = vsel %vm217, %v404, 0.0
        %v425 = vadd.f32 %v423, %v424
        %426 = vadd.xlane.f32.xlu0 %v425
        %v427 = vpop.xlane.xlu0 %426
        %v428 = vrot.slane %v427, 4
        %v429 = vadd.f32 %v427, %v428
        %v430 = vrot.slane %v429, 2
        %v431 = vadd.f32 %v429, %v430
        %v432 = vrot.slane %v431, 1
        %v433 = vadd.f32 %v431, %v432
        %s434 = vtos %v433
        %v435 = vsel %vm217, %v407, 0.0
        %v436 = vsel %vm217, %v408, 0.0
        %v437 = vadd.f32 %v435, %v436
        %438 = vadd.xlane.f32.xlu0 %v437
        %v439 = vpop.xlane.xlu0 %438
        %v440 = vrot.slane %v439, 4
        %v441 = vadd.f32 %v439, %v440
        %v442 = vrot.slane %v441, 2
        %v443 = vadd.f32 %v441, %v442
        %v444 = vrot.slane %v443, 1
        %v445 = vadd.f32 %v443, %v444
        %s446 = vtos %v445
        %v447 = vsel %vm329, 1, 0
        %v448 = vsel %vm330, 1, 0
        %v449 = vcvt.s32.f32 %v447
        %v450 = vcvt.s32.f32 %v448
        %v451 = vsel %vm395, 1, 0
        %v452 = vsel %vm396, 1, 0
        %v453 = vcvt.s32.f32 %v451
        %v454 = vcvt.s32.f32 %v452
        %v455 = vmul.f32 %v449, %v453
        %v456 = vmul.f32 %v450, %v454
        %v457 = vsel %vm217, %v455, 0.0
        %v458 = vsel %vm217, %v456, 0.0
        %v459 = vadd.f32 %v457, %v458
        %460 = vadd.xlane.f32.xlu0 %v459
        %v461 = vpop.xlane.xlu0 %460
        %v462 = vrot.slane %v461, 4
        %v463 = vadd.f32 %v461, %v462
        %v464 = vrot.slane %v463, 2
        %v465 = vadd.f32 %v463, %v464
        %v466 = vrot.slane %v465, 1
        %v467 = vadd.f32 %v465, %v466
        %s468 = vtos %v467
        %v469 = vsel %vm217, %v449, 0.0
        %v470 = vsel %vm217, %v450, 0.0
        %v471 = vadd.f32 %v469, %v470
        %472 = vadd.xlane.f32.xlu0 %v471
        %v473 = vpop.xlane.xlu0 %472
        %v474 = vrot.slane %v473, 4
        %v475 = vadd.f32 %v473, %v474
        %v476 = vrot.slane %v475, 2
        %v477 = vadd.f32 %v475, %v476
        %v478 = vrot.slane %v477, 1
        %v479 = vadd.f32 %v477, %v478
        %s480 = vtos %v479
        %v481 = vsel %vm217, %v453, 0.0
        %v482 = vsel %vm217, %v454, 0.0
        %v483 = vadd.f32 %v481, %v482
        %484 = vadd.xlane.f32.xlu0 %v483
        %v485 = vpop.xlane.xlu0 %484
        %v486 = vrot.slane %v485, 4
        %v487 = vadd.f32 %v485, %v486
        %v488 = vrot.slane %v487, 2
        %v489 = vadd.f32 %v487, %v488
        %v490 = vrot.slane %v489, 1
        %v491 = vadd.f32 %v489, %v490
        %s492 = vtos %v491
        %v493 = vsel %vm333, 1, 0
        %v494 = vsel %vm334, 1, 0
        %v495 = vcvt.s32.f32 %v493
        %v496 = vcvt.s32.f32 %v494
        %v497 = vsel %vm399, 1, 0
        %v498 = vsel %vm400, 1, 0
        %v499 = vcvt.s32.f32 %v497
        %v500 = vcvt.s32.f32 %v498
        %v501 = vmul.f32 %v495, %v499
        %v502 = vmul.f32 %v496, %v500
        %v503 = vsel %vm217, %v501, 0.0
        %v504 = vsel %vm217, %v502, 0.0
        %v505 = vadd.f32 %v503, %v504
        %506 = vadd.xlane.f32.xlu0 %v505
        %v507 = vpop.xlane.xlu0 %506
        %v508 = vrot.slane %v507, 4
        %v509 = vadd.f32 %v507, %v508
        %v510 = vrot.slane %v509, 2
        %v511 = vadd.f32 %v509, %v510
        %v512 = vrot.slane %v511, 1
        %v513 = vadd.f32 %v511, %v512
        %s514 = vtos %v513
        %v515 = vsel %vm217, %v495, 0.0
        %v516 = vsel %vm217, %v496, 0.0
        %v517 = vadd.f32 %v515, %v516
        %518 = vadd.xlane.f32.xlu0 %v517
        %v519 = vpop.xlane.xlu0 %518
        %v520 = vrot.slane %v519, 4
        %v521 = vadd.f32 %v519, %v520
        %v522 = vrot.slane %v521, 2
        %v523 = vadd.f32 %v521, %v522
        %v524 = vrot.slane %v523, 1
        %v525 = vadd.f32 %v523, %v524
        %s526 = vtos %v525
        %v527 = vsel %vm217, %v499, 0.0
        %v528 = vsel %vm217, %v500, 0.0
        %v529 = vadd.f32 %v527, %v528
        %530 = vadd.xlane.f32.xlu0 %v529
        %v531 = vpop.xlane.xlu0 %530
        %v532 = vrot.slane %v531, 4
        %v533 = vadd.f32 %v531, %v532
        %v534 = vrot.slane %v533, 2
        %v535 = vadd.f32 %v533, %v534
        %v536 = vrot.slane %v535, 1
        %v537 = vadd.f32 %v535, %v536
        %s538 = vtos %v537
        %v539 = vsel %vm321, 1.0, 0.0
        %v540 = vsel %vm322, 1.0, 0.0
        %v541 = vsel %vm217, %v539, 0.0
        %v542 = vsel %vm217, %v540, 0.0
        %v543 = vadd.f32 %v541, %v542
        %544 = vadd.xlane.f32.xlu0 %v543
        %v545 = vpop.xlane.xlu0 %544
        %v546 = vrot.slane %v545, 4
        %v547 = vadd.f32 %v545, %v546
        %v548 = vrot.slane %v547, 2
        %v549 = vadd.f32 %v547, %v548
        %v550 = vrot.slane %v549, 1
        %v551 = vadd.f32 %v549, %v550
        %s552 = vtos %v551
        %v553 = vsel %vm387, 1.0, 0.0
        %v554 = vsel %vm388, 1.0, 0.0
        %v555 = vsel %vm217, %v553, 0.0
        %v556 = vsel %vm217, %v554, 0.0
        %v557 = vadd.f32 %v555, %v556
        %558 = vadd.xlane.f32.xlu0 %v557
        %v559 = vpop.xlane.xlu0 %558
        %v560 = vrot.slane %v559, 4
        %v561 = vadd.f32 %v559, %v560
        %v562 = vrot.slane %v561, 2
        %v563 = vadd.f32 %v561, %v562
        %v564 = vrot.slane %v563, 1
        %v565 = vadd.f32 %v563, %v564
        %s566 = vtos %v565
        %567 = vst [vmem:[#allocation2] sm:$0xff] 0.0
        %568 = vst [vmem:[#allocation2 + $0x8] sm:$0xff] 0.0
        %569 = vst [vmem:[#allocation2 + $0x10] sm:$0xff] 0.0
        %570 = vst [vmem:[#allocation2 + $0x18] sm:$0xff] 0.0
        %571 = vst [vmem:[#allocation2 + $0x20] sm:$0xff] 0.0
        %572 = vst [vmem:[#allocation2 + $0x28] sm:$0xff] 0.0
        %573 = vst [vmem:[#allocation2 + $0x30] sm:$0xff] 0.0
        %574 = vst [vmem:[#allocation2 + $0x38] sm:$0xff] 0.0
        %575 = vst.msk [vmem:[#allocation2] sm:$0xff] %vm217, %v202
        %576 = vst.msk [vmem:[#allocation2 + $0x8] sm:$0xff] %vm217, %v203
        %s577 = scalar_lea.vmem [#allocation2], 32
        %578 = vst.msk [vmem:[%s577] sm:$0xff] %vm217, %v200
        %579 = vst.msk [vmem:[%s577 + $0x8] sm:$0xff] %vm217, %v201
        %v580 = vld [vmem:[#allocation2] sm:$0xff]
        %v581 = vld [vmem:[#allocation2 + $0x8] sm:$0xff]
        %v582 = vld [vmem:[#allocation2 + $0x10] sm:$0xff]
        %v583 = vld [vmem:[#allocation2 + $0x18] sm:$0xff]
        %v584 = vld [vmem:[%s577] sm:$0xff]
        %v585 = vld [vmem:[%s577 + $0x8] sm:$0xff]
        %v586 = vld [vmem:[%s577 + $0x10] sm:$0xff]
        %v587 = vld [vmem:[%s577 + $0x18] sm:$0xff]
        loop: start=0, step=1, limit=3
        $region37: #{adaptive_skeleton_loss.1} parent=27 // loop_pre_header
          _
        $region38: #{adaptive_skeleton_loss.1} parent=27 // loop_header
          %s589 = sphi 0, %s593
          %p590 = scmp.ge.s32.totalorder %s589, 3
          %v594 = vphi %v580, %v894
          %v595 = vphi %v581, %v895
          %v596 = vphi %v582, %v896
          %v597 = vphi %v583, %v897
          %v598 = vphi 1.0, %v954
          %v599 = vphi 1.0, %v955
          %v600 = vphi 1.0, %v956
          %v601 = vphi 1.0, %v957
          %v602 = vphi %v584, %v942
          %v603 = vphi %v585, %v943
          %v604 = vphi %v586, %v944
          %v605 = vphi %v587, %v945
          %v606 = vphi 1.0, %v966
          %v607 = vphi 1.0, %v967
          %v608 = vphi 1.0, %v968
          %v609 = vphi 1.0, %v969
        $region39: #{adaptive_skeleton_loss.1} parent=27 // loop_header_branch
          %592 = sbr.rel (%p590) target = $region43
        $region40: #{adaptive_skeleton_loss.1} parent=27 // loop_body
          %v610 = vrot.slane %v594, 7
          %v611 = vrot.slane %v595, 7
          %v612 = vrot.slane %v596, 7
          %v613 = vrot.slane %v597, 7
          %v614 = vsel %vm308, %v612, %v613
          %v615 = vsel %vm308, %v611, %v612
          %v616 = vsel %vm308, %v610, %v611
          %v617 = vsel %vm308, %v613, %v610
          %v618 = vmax.f32 %v594, %v617
          %v619 = vmax.f32 %v595, %v616
          %v620 = vmax.f32 %v596, %v615
          %v621 = vmax.f32 %v597, %v614
          %v622 = vrot.slane %v594, 1
          %v623 = vrot.slane %v595, 1
          %v624 = vrot.slane %v596, 1
          %v625 = vrot.slane %v597, 1
          %v626 = vsel %vm295, %v624, %v625
          %v627 = vsel %vm295, %v623, %v624
          %v628 = vsel %vm295, %v622, %v623
          %v629 = vsel %vm295, %v625, %v622
          %v630 = vmax.f32 %v618, %v628
          %v631 = vmax.f32 %v619, %v627
          %v632 = vmax.f32 %v620, %v626
          %v633 = vmax.f32 %v621, %v629
          %634 = vrot.lane.b32.xlu0 %v630, 1
          %v635 = vpop.permute.xlu0 %634
          %636 = vrot.lane.b32.xlu0 %v631, 1
          %v637 = vpop.permute.xlu0 %636
          %638 = vrot.lane.b32.xlu0 %v632, 1
          %v639 = vpop.permute.xlu0 %638
          %640 = vrot.lane.b32.xlu0 %v633, 1
          %v641 = vpop.permute.xlu0 %640
          %v642 = vmax.f32 %v630, %v635
          %v643 = vmax.f32 %v631, %v637
          %v644 = vmax.f32 %v632, %v639
          %v645 = vmax.f32 %v633, %v641
          %646 = vrot.lane.b32.xlu0 %v630, 127
          %v647 = vpop.permute.xlu0 %646
          %648 = vrot.lane.b32.xlu0 %v631, 127
          %v649 = vpop.permute.xlu0 %648
          %650 = vrot.lane.b32.xlu0 %v632, 127
          %v651 = vpop.permute.xlu0 %650
          %652 = vrot.lane.b32.xlu0 %v633, 127
          %v653 = vpop.permute.xlu0 %652
          %v654 = vmax.f32 %v642, %v647
          %v655 = vmax.f32 %v643, %v649
          %v656 = vmax.f32 %v644, %v651
          %v657 = vmax.f32 %v645, %v653
          %v658 = vrot.slane %v602, 7
          %v659 = vrot.slane %v603, 7
          %v660 = vrot.slane %v604, 7
          %v661 = vrot.slane %v605, 7
          %v662 = vsel %vm308, %v660, %v661
          %v663 = vsel %vm308, %v659, %v660
          %v664 = vsel %vm308, %v658, %v659
          %v665 = vsel %vm308, %v661, %v658
          %v666 = vmax.f32 %v602, %v665
          %v667 = vmax.f32 %v603, %v664
          %v668 = vmax.f32 %v604, %v663
          %v669 = vmax.f32 %v605, %v662
          %v670 = vrot.slane %v602, 1
          %v671 = vrot.slane %v603, 1
          %v672 = vrot.slane %v604, 1
          %v673 = vrot.slane %v605, 1
          %v674 = vsel %vm295, %v672, %v673
          %v675 = vsel %vm295, %v671, %v672
          %v676 = vsel %vm295, %v670, %v671
          %v677 = vsel %vm295, %v673, %v670
          %v678 = vmax.f32 %v666, %v676
          %v679 = vmax.f32 %v667, %v675
          %v680 = vmax.f32 %v668, %v674
          %v681 = vmax.f32 %v669, %v677
          %682 = vrot.lane.b32.xlu0 %v678, 1
          %v683 = vpop.permute.xlu0 %682
          %684 = vrot.lane.b32.xlu0 %v679, 1
          %v685 = vpop.permute.xlu0 %684
          %686 = vrot.lane.b32.xlu0 %v680, 1
          %v687 = vpop.permute.xlu0 %686
          %688 = vrot.lane.b32.xlu0 %v681, 1
          %v689 = vpop.permute.xlu0 %688
          %v690 = vmax.f32 %v678, %v683
          %v691 = vmax.f32 %v679, %v685
          %v692 = vmax.f32 %v680, %v687
          %v693 = vmax.f32 %v681, %v689
          %694 = vrot.lane.b32.xlu0 %v678, 127
          %v695 = vpop.permute.xlu0 %694
          %696 = vrot.lane.b32.xlu0 %v679, 127
          %v697 = vpop.permute.xlu0 %696
          %698 = vrot.lane.b32.xlu0 %v680, 127
          %v699 = vpop.permute.xlu0 %698
          %700 = vrot.lane.b32.xlu0 %v681, 127
          %v701 = vpop.permute.xlu0 %700
          %v702 = vmax.f32 %v690, %v695
          %v703 = vmax.f32 %v691, %v697
          %v704 = vmax.f32 %v692, %v699
          %v705 = vmax.f32 %v693, %v701
          %vm706 = vcmp.le.f32.partialorder %v654, 0.5
          %vm707 = vcmp.le.f32.partialorder %v655, 0.5
          %vm708 = vcmp.le.f32.partialorder %v656, 0.5
          %vm709 = vcmp.le.f32.partialorder %v657, 0.5
          %v710 = vsel %vm706, 1.0, 0.0
          %v711 = vsel %vm707, 1.0, 0.0
          %v712 = vsel %vm708, 1.0, 0.0
          %v713 = vsel %vm709, 1.0, 0.0
          %v714 = vadd.f32 %v598, %v710
          %v715 = vadd.f32 %v599, %v711
          %v716 = vadd.f32 %v600, %v712
          %v717 = vadd.f32 %v601, %v713
          %vm718 = vcmp.le.f32.partialorder %v702, 0.5
          %vm719 = vcmp.le.f32.partialorder %v703, 0.5
          %vm720 = vcmp.le.f32.partialorder %v704, 0.5
          %vm721 = vcmp.le.f32.partialorder %v705, 0.5
          %v722 = vsel %vm718, 1.0, 0.0
          %v723 = vsel %vm719, 1.0, 0.0
          %v724 = vsel %vm720, 1.0, 0.0
          %v725 = vsel %vm721, 1.0, 0.0
          %v726 = vadd.f32 %v606, %v722
          %v727 = vadd.f32 %v607, %v723
          %v728 = vadd.f32 %v608, %v724
          %v729 = vadd.f32 %v609, %v725
          %v730 = vrot.slane %v654, 7
          %v731 = vrot.slane %v655, 7
          %v732 = vrot.slane %v656, 7
          %v733 = vrot.slane %v657, 7
          %v734 = vsel %vm308, %v732, %v733
          %v735 = vsel %vm308, %v731, %v732
          %v736 = vsel %vm308, %v730, %v731
          %v737 = vsel %vm308, %v733, %v730
          %v738 = vmax.f32 %v654, %v737
          %v739 = vmax.f32 %v655, %v736
          %v740 = vmax.f32 %v656, %v735
          %v741 = vmax.f32 %v657, %v734
          %v742 = vrot.slane %v654, 1
          %v743 = vrot.slane %v655, 1
          %v744 = vrot.slane %v656, 1
          %v745 = vrot.slane %v657, 1
          %v746 = vsel %vm295, %v744, %v745
          %v747 = vsel %vm295, %v743, %v744
          %v748 = vsel %vm295, %v742, %v743
          %v749 = vsel %vm295, %v745, %v742
          %v750 = vmax.f32 %v738, %v748
          %v751 = vmax.f32 %v739, %v747
          %v752 = vmax.f32 %v740, %v746
          %v753 = vmax.f32 %v741, %v749
          %754 = vrot.lane.b32.xlu0 %v750, 1
          %v755 = vpop.permute.xlu0 %754
          %756 = vrot.lane.b32.xlu0 %v751, 1
          %v757 = vpop.permute.xlu0 %756
          %758 = vrot.lane.b32.xlu0 %v752, 1
          %v759 = vpop.permute.xlu0 %758
          %760 = vrot.lane.b32.xlu0 %v753, 1
          %v761 = vpop.permute.xlu0 %760
          %v762 = vmax.f32 %v750, %v755
          %v763 = vmax.f32 %v751, %v757
          %v764 = vmax.f32 %v752, %v759
          %v765 = vmax.f32 %v753, %v761
          %766 = vrot.lane.b32.xlu0 %v750, 127
          %v767 = vpop.permute.xlu0 %766
          %768 = vrot.lane.b32.xlu0 %v751, 127
          %v769 = vpop.permute.xlu0 %768
          %770 = vrot.lane.b32.xlu0 %v752, 127
          %v771 = vpop.permute.xlu0 %770
          %772 = vrot.lane.b32.xlu0 %v753, 127
          %v773 = vpop.permute.xlu0 %772
          %v774 = vmax.f32 %v762, %v767
          %v775 = vmax.f32 %v763, %v769
          %v776 = vmax.f32 %v764, %v771
          %v777 = vmax.f32 %v765, %v773
          %v778 = vrot.slane %v702, 7
          %v779 = vrot.slane %v703, 7
          %v780 = vrot.slane %v704, 7
          %v781 = vrot.slane %v705, 7
          %v782 = vsel %vm308, %v780, %v781
          %v783 = vsel %vm308, %v779, %v780
          %v784 = vsel %vm308, %v778, %v779
          %v785 = vsel %vm308, %v781, %v778
          %v786 = vmax.f32 %v702, %v785
          %v787 = vmax.f32 %v703, %v784
          %v788 = vmax.f32 %v704, %v783
          %v789 = vmax.f32 %v705, %v782
          %v790 = vrot.slane %v702, 1
          %v791 = vrot.slane %v703, 1
          %v792 = vrot.slane %v704, 1
          %v793 = vrot.slane %v705, 1
          %v794 = vsel %vm295, %v792, %v793
          %v795 = vsel %vm295, %v791, %v792
          %v796 = vsel %vm295, %v790, %v791
          %v797 = vsel %vm295, %v793, %v790
          %v798 = vmax.f32 %v786, %v796
          %v799 = vmax.f32 %v787, %v795
          %v800 = vmax.f32 %v788, %v794
          %v801 = vmax.f32 %v789, %v797
          %802 = vrot.lane.b32.xlu0 %v798, 1
          %v803 = vpop.permute.xlu0 %802
          %804 = vrot.lane.b32.xlu0 %v799, 1
          %v805 = vpop.permute.xlu0 %804
          %806 = vrot.lane.b32.xlu0 %v800, 1
          %v807 = vpop.permute.xlu0 %806
          %808 = vrot.lane.b32.xlu0 %v801, 1
          %v809 = vpop.permute.xlu0 %808
          %v810 = vmax.f32 %v798, %v803
          %v811 = vmax.f32 %v799, %v805
          %v812 = vmax.f32 %v800, %v807
          %v813 = vmax.f32 %v801, %v809
          %814 = vrot.lane.b32.xlu0 %v798, 127
          %v815 = vpop.permute.xlu0 %814
          %816 = vrot.lane.b32.xlu0 %v799, 127
          %v817 = vpop.permute.xlu0 %816
          %818 = vrot.lane.b32.xlu0 %v800, 127
          %v819 = vpop.permute.xlu0 %818
          %820 = vrot.lane.b32.xlu0 %v801, 127
          %v821 = vpop.permute.xlu0 %820
          %v822 = vmax.f32 %v810, %v815
          %v823 = vmax.f32 %v811, %v817
          %v824 = vmax.f32 %v812, %v819
          %v825 = vmax.f32 %v813, %v821
          %vm826 = vcmp.le.f32.partialorder %v774, 0.5
          %vm827 = vcmp.le.f32.partialorder %v775, 0.5
          %vm828 = vcmp.le.f32.partialorder %v776, 0.5
          %vm829 = vcmp.le.f32.partialorder %v777, 0.5
          %v830 = vsel %vm826, 1.0, 0.0
          %v831 = vsel %vm827, 1.0, 0.0
          %v832 = vsel %vm828, 1.0, 0.0
          %v833 = vsel %vm829, 1.0, 0.0
          %v834 = vadd.f32 %v714, %v830
          %v835 = vadd.f32 %v715, %v831
          %v836 = vadd.f32 %v716, %v832
          %v837 = vadd.f32 %v717, %v833
          %vm838 = vcmp.le.f32.partialorder %v822, 0.5
          %vm839 = vcmp.le.f32.partialorder %v823, 0.5
          %vm840 = vcmp.le.f32.partialorder %v824, 0.5
          %vm841 = vcmp.le.f32.partialorder %v825, 0.5
          %v842 = vsel %vm838, 1.0, 0.0
          %v843 = vsel %vm839, 1.0, 0.0
          %v844 = vsel %vm840, 1.0, 0.0
          %v845 = vsel %vm841, 1.0, 0.0
          %v846 = vadd.f32 %v726, %v842
          %v847 = vadd.f32 %v727, %v843
          %v848 = vadd.f32 %v728, %v844
          %v849 = vadd.f32 %v729, %v845
          %v850 = vrot.slane %v774, 7
          %v851 = vrot.slane %v775, 7
          %v852 = vrot.slane %v776, 7
          %v853 = vrot.slane %v777, 7
          %v854 = vsel %vm308, %v852, %v853
          %v855 = vsel %vm308, %v851, %v852
          %v856 = vsel %vm308, %v850, %v851
          %v857 = vsel %vm308, %v853, %v850
          %v858 = vmax.f32 %v774, %v857
          %v859 = vmax.f32 %v775, %v856
          %v860 = vmax.f32 %v776, %v855
          %v861 = vmax.f32 %v777, %v854
          %v862 = vrot.slane %v774, 1
          %v863 = vrot.slane %v775, 1
          %v864 = vrot.slane %v776, 1
          %v865 = vrot.slane %v777, 1
          %v866 = vsel %vm295, %v864, %v865
          %v867 = vsel %vm295, %v863, %v864
          %v868 = vsel %vm295, %v862, %v863
          %v869 = vsel %vm295, %v865, %v862
          %v870 = vmax.f32 %v858, %v868
          %v871 = vmax.f32 %v859, %v867
          %v872 = vmax.f32 %v860, %v866
          %v873 = vmax.f32 %v861, %v869
          %874 = vrot.lane.b32.xlu0 %v870, 1
          %v875 = vpop.permute.xlu0 %874
          %876 = vrot.lane.b32.xlu0 %v871, 1
          %v877 = vpop.permute.xlu0 %876
          %878 = vrot.lane.b32.xlu0 %v872, 1
          %v879 = vpop.permute.xlu0 %878
          %880 = vrot.lane.b32.xlu0 %v873, 1
          %v881 = vpop.permute.xlu0 %880
          %v882 = vmax.f32 %v870, %v875
          %v883 = vmax.f32 %v871, %v877
          %v884 = vmax.f32 %v872, %v879
          %v885 = vmax.f32 %v873, %v881
          %886 = vrot.lane.b32.xlu0 %v870, 127
          %v887 = vpop.permute.xlu0 %886
          %888 = vrot.lane.b32.xlu0 %v871, 127
          %v889 = vpop.permute.xlu0 %888
          %890 = vrot.lane.b32.xlu0 %v872, 127
          %v891 = vpop.permute.xlu0 %890
          %892 = vrot.lane.b32.xlu0 %v873, 127
          %v893 = vpop.permute.xlu0 %892
          %v894 = vmax.f32 %v882, %v887
          %v895 = vmax.f32 %v883, %v889
          %v896 = vmax.f32 %v884, %v891
          %v897 = vmax.f32 %v885, %v893
          %v898 = vrot.slane %v822, 7
          %v899 = vrot.slane %v823, 7
          %v900 = vrot.slane %v824, 7
          %v901 = vrot.slane %v825, 7
          %v902 = vsel %vm308, %v900, %v901
          %v903 = vsel %vm308, %v899, %v900
          %v904 = vsel %vm308, %v898, %v899
          %v905 = vsel %vm308, %v901, %v898
          %v906 = vmax.f32 %v822, %v905
          %v907 = vmax.f32 %v823, %v904
          %v908 = vmax.f32 %v824, %v903
          %v909 = vmax.f32 %v825, %v902
          %v910 = vrot.slane %v822, 1
          %v911 = vrot.slane %v823, 1
          %v912 = vrot.slane %v824, 1
          %v913 = vrot.slane %v825, 1
          %v914 = vsel %vm295, %v912, %v913
          %v915 = vsel %vm295, %v911, %v912
          %v916 = vsel %vm295, %v910, %v911
          %v917 = vsel %vm295, %v913, %v910
          %v918 = vmax.f32 %v906, %v916
          %v919 = vmax.f32 %v907, %v915
          %v920 = vmax.f32 %v908, %v914
          %v921 = vmax.f32 %v909, %v917
          %922 = vrot.lane.b32.xlu0 %v918, 1
          %v923 = vpop.permute.xlu0 %922
          %924 = vrot.lane.b32.xlu0 %v919, 1
          %v925 = vpop.permute.xlu0 %924
          %926 = vrot.lane.b32.xlu0 %v920, 1
          %v927 = vpop.permute.xlu0 %926
          %928 = vrot.lane.b32.xlu0 %v921, 1
          %v929 = vpop.permute.xlu0 %928
          %v930 = vmax.f32 %v918, %v923
          %v931 = vmax.f32 %v919, %v925
          %v932 = vmax.f32 %v920, %v927
          %v933 = vmax.f32 %v921, %v929
          %934 = vrot.lane.b32.xlu0 %v918, 127
          %v935 = vpop.permute.xlu0 %934
          %936 = vrot.lane.b32.xlu0 %v919, 127
          %v937 = vpop.permute.xlu0 %936
          %938 = vrot.lane.b32.xlu0 %v920, 127
          %v939 = vpop.permute.xlu0 %938
          %940 = vrot.lane.b32.xlu0 %v921, 127
          %v941 = vpop.permute.xlu0 %940
          %v942 = vmax.f32 %v930, %v935
          %v943 = vmax.f32 %v931, %v937
          %v944 = vmax.f32 %v932, %v939
          %v945 = vmax.f32 %v933, %v941
          %vm946 = vcmp.le.f32.partialorder %v894, 0.5
          %vm947 = vcmp.le.f32.partialorder %v895, 0.5
          %vm948 = vcmp.le.f32.partialorder %v896, 0.5
          %vm949 = vcmp.le.f32.partialorder %v897, 0.5
          %v950 = vsel %vm946, 1.0, 0.0
          %v951 = vsel %vm947, 1.0, 0.0
          %v952 = vsel %vm948, 1.0, 0.0
          %v953 = vsel %vm949, 1.0, 0.0
          %v954 = vadd.f32 %v834, %v950
          %v955 = vadd.f32 %v835, %v951
          %v956 = vadd.f32 %v836, %v952
          %v957 = vadd.f32 %v837, %v953
          %vm958 = vcmp.le.f32.partialorder %v942, 0.5
          %vm959 = vcmp.le.f32.partialorder %v943, 0.5
          %vm960 = vcmp.le.f32.partialorder %v944, 0.5
          %vm961 = vcmp.le.f32.partialorder %v945, 0.5
          %v962 = vsel %vm958, 1.0, 0.0
          %v963 = vsel %vm959, 1.0, 0.0
          %v964 = vsel %vm960, 1.0, 0.0
          %v965 = vsel %vm961, 1.0, 0.0
          %v966 = vadd.f32 %v846, %v962
          %v967 = vadd.f32 %v847, %v963
          %v968 = vadd.f32 %v848, %v964
          %v969 = vadd.f32 %v849, %v965
        $region41: #{adaptive_skeleton_loss.1} parent=27 // loop_footer
          %s593 = sadd.s32 1, %s589
        $region42: #{adaptive_skeleton_loss.1} parent=27 // loop_footer_branch
          %588 = sbr.rel target = $region38
        $region43: #{adaptive_skeleton_loss.1} parent=27 // loop_exit
          _
        %vm970 = vcmp.gt.f32.partialorder %v584, 0.5
        %vm971 = vcmp.gt.f32.partialorder %v585, 0.5
        %vm972 = vcmp.gt.f32.partialorder %v586, 0.5
        %vm973 = vcmp.gt.f32.partialorder %v587, 0.5
        %v974 = vsel %vm970, %v598, 0.0
        %v975 = vsel %vm971, %v599, 0.0
        %v976 = vsel %vm972, %v600, 0.0
        %v977 = vsel %vm973, %v601, 0.0
        %v978 = vadd.f32 %v974, %v975
        %v979 = vadd.f32 %v978, %v976
        %v980 = vadd.f32 %v979, %v977
        %981 = vadd.xlane.f32.xlu0 %v980
        %v982 = vpop.xlane.xlu0 %981
        %v983 = vrot.slane %v982, 4
        %v984 = vadd.f32 %v982, %v983
        %v985 = vrot.slane %v984, 2
        %v986 = vadd.f32 %v984, %v985
        %v987 = vrot.slane %v986, 1
        %v988 = vadd.f32 %v986, %v987
        %s989 = vtos %v988
        %vm990 = vcmp.gt.f32.partialorder %v580, 0.5
        %vm991 = vcmp.gt.f32.partialorder %v581, 0.5
        %vm992 = vcmp.gt.f32.partialorder %v582, 0.5
        %vm993 = vcmp.gt.f32.partialorder %v583, 0.5
        %v994 = vsel %vm990, %v606, 0.0
        %v995 = vsel %vm991, %v607, 0.0
        %v996 = vsel %vm992, %v608, 0.0
        %v997 = vsel %vm993, %v609, 0.0
        %v998 = vadd.f32 %v994, %v995
        %v999 = vadd.f32 %v998, %v996
        %v1000 = vadd.f32 %v999, %v997
        %1001 = vadd.xlane.f32.xlu0 %v1000
        %v1002 = vpop.xlane.xlu0 %1001
        %v1003 = vrot.slane %v1002, 4
        %v1004 = vadd.f32 %v1002, %v1003
        %v1005 = vrot.slane %v1004, 2
        %v1006 = vadd.f32 %v1004, %v1005
        %v1007 = vrot.slane %v1006, 1
        %v1008 = vadd.f32 %v1006, %v1007
        %s1009 = vtos %v1008
        %vm1010 = vcmp.eq.s32.totalorder %v208, 0
        %v1011 = vstv %s229
        %v1012 = vsel %vm1010, %v1011, 0.0
        %vm1013 = vcmp.eq.s32.totalorder %v208, 1
        %v1014 = vstv %s241
        %v1015 = vsel %vm1013, %v1014, 0.0
        %vm1016 = vcmp.eq.s32.totalorder %v208, 2
        %v1017 = vstv %s253
        %v1018 = vsel %vm1016, %v1017, 0.0
        %vm1019 = vcmp.eq.s32.totalorder %v208, 3
        %v1020 = vstv %s422
        %v1021 = vsel %vm1019, %v1020, 0.0
        %vm1022 = vcmp.eq.s32.totalorder %v208, 4
        %v1023 = vstv %s434
        %v1024 = vsel %vm1022, %v1023, 0.0
        %vm1025 = vcmp.eq.s32.totalorder %v208, 5
        %v1026 = vstv %s446
        %v1027 = vsel %vm1025, %v1026, 0.0
        %vm1028 = vcmp.eq.s32.totalorder %v208, 6
        %v1029 = vstv %s468
        %v1030 = vsel %vm1028, %v1029, 0.0
        %vm1031 = vcmp.eq.s32.totalorder %v208, 7
        %v1032 = vstv %s480
        %v1033 = vsel %vm1031, %v1032, 0.0
        %vm1034 = vcmp.eq.s32.totalorder %v208, 8
        %v1035 = vstv %s492
        %v1036 = vsel %vm1034, %v1035, 0.0
        %vm1037 = vcmp.eq.s32.totalorder %v208, 9
        %v1038 = vstv %s514
        %v1039 = vsel %vm1037, %v1038, 0.0
        %vm1040 = vcmp.eq.s32.totalorder %v208, 10
        %v1041 = vstv %s526
        %v1042 = vsel %vm1040, %v1041, 0.0
        %vm1043 = vcmp.eq.s32.totalorder %v208, 11
        %v1044 = vstv %s538
        %v1045 = vsel %vm1043, %v1044, 0.0
        %vm1046 = vcmp.eq.s32.totalorder %v208, 12
        %v1047 = vstv %s989
        %v1048 = vsel %vm1046, %v1047, 0.0
        %vm1049 = vcmp.eq.s32.totalorder %v208, 13
        %v1050 = vstv %s552
        %v1051 = vsel %vm1049, %v1050, 0.0
        %vm1052 = vcmp.eq.s32.totalorder %v208, 14
        %v1053 = vstv %s1009
        %v1054 = vsel %vm1052, %v1053, 0.0
        %vm1055 = vcmp.eq.s32.totalorder %v208, 15
        %v1056 = vstv %s566
        %v1057 = vsel %vm1055, %v1056, 0.0
        %v1058 = vadd.f32 %v1012, %v1015
        %v1059 = vadd.f32 %v1018, %v1021
        %v1060 = vadd.f32 %v1024, %v1027
        %v1061 = vadd.f32 %v1030, %v1033
        %v1062 = vadd.f32 %v1036, %v1039
        %v1063 = vadd.f32 %v1042, %v1045
        %v1064 = vadd.f32 %v1048, %v1051
        %v1065 = vadd.f32 %v1054, %v1057
        %v1066 = vadd.f32 %v1058, %v1059
        %v1067 = vadd.f32 %v1060, %v1061
        %v1068 = vadd.f32 %v1062, %v1063
        %v1069 = vadd.f32 %v1064, %v1065
        %v1070 = vadd.f32 %v1066, %v1067
        %v1071 = vadd.f32 %v1068, %v1069
        %v1072 = vadd.f32 %v1070, %v1071
        %1073 = vst [vmem:[%s199] sm:$0x1] %v1072
        %p1074 = scmp.lt.s32.totalorder %s19, 1
        %s1075 = scalar_select %p1074, %s19, 1
        %s1076 = scalar_lea.vmem %s2, %s1075
        // Predicated region
        $region44: #{adaptive_skeleton_loss.1} parent=27 // pred_check
          %p1077 = pneg %p89
        $region45: #{adaptive_skeleton_loss.1} parent=27 // pred_check_branch
          %1079 = sbr.rel (%p1077) target = $region47
        $region46: #{adaptive_skeleton_loss.1} parent=27 // pred_region
          _
        $region47: #{adaptive_skeleton_loss.1} parent=27 // pred_fallthru
          _
      $region28: #{adaptive_skeleton_loss.1} parent=5 // pred_fallthru
        _
      %p1080 = scmp.le.s32.totalorder 2, %s14
      // Predicated region
      $region48: #{adaptive_skeleton_loss.1} parent=5 // pred_check
        %p1081 = pneg %p1080
      $region49: #{adaptive_skeleton_loss.1} parent=5 // pred_check_branch
        %1083 = sbr.rel (%p1081) target = $region51
      $region50: #{adaptive_skeleton_loss.1} parent=5 // pred_region
        %s1084 = ssub.s32 %s14, 2
        // Predicated region
        $region52: #{adaptive_skeleton_loss.1} parent=50 // pred_check
          %p1085 = pneg %p95
        $region53: #{adaptive_skeleton_loss.1} parent=50 // pred_check_branch
          %1087 = sbr.rel (%p1085) target = $region55
        $region54: #{adaptive_skeleton_loss.1} parent=50 // pred_region
          %p1088 = scmp.lt.s32.totalorder %s20, 1
          %s1089 = scalar_select %p1088, %s20, 1
          %s1090 = scalar_lea.vmem %s2, %s1089
        $region55: #{adaptive_skeleton_loss.1} parent=50 // pred_fallthru
          _
      $region51: #{adaptive_skeleton_loss.1} parent=5 // pred_fallthru
        _
    $region6: #{adaptive_skeleton_loss.1} parent=1 // loop_footer
      %s18 = sadd.s32 1, %s14
    $region7: #{adaptive_skeleton_loss.1} parent=1 // loop_footer_branch
      %13 = sbr.rel target = $region3
    $region8: #{adaptive_skeleton_loss.1} parent=1 // loop_exit
      _
    %1091 = vsyncpa [#allocation4], 1
    %s1092 = scalar_lea.sflag [#allocation4], 1
    %1093 = vsyncpa %s1092, 1
    %1094 = vsyncpa [#allocation6], 1
    %s1095 = scalar_lea.sflag [#allocation6], 1
    %1096 = vsyncpa %s1095, 1

</llo_original>
